<compile_context>
chip_gen: v7x
topology: tpu7x:2x2x1
jax: 0.10.0
libtpu: 0.0.40
codegen_flags: <defaults>
</compile_context>

<pallas_src>
import functools

import jax
import jax.numpy as jnp
from jax.experimental import pallas as pl
from jax.experimental.pallas import tpu as pltpu

MINDIV = 1e-10


def _sigmoid(x):
    # One EUP transcendental instead of exp + divide.
    return 0.5 * jnp.tanh(0.5 * x) + 0.5


def _make_kernel(compute_dtype):
    def snn_kernel(ml_ref, w1t_ref, b1_ref, w2t_ref, b2_ref,
                   w3t_ref, b3_ref, w4_ref, b4_ref, out_ref):
        ml = ml_ref[...]                       # [7, TM] f32, lane-dense

        m0 = ml[0:1, :]
        m1 = ml[1:2, :]
        m2 = ml[2:3, :]
        m3 = ml[3:4, :]
        m4 = ml[4:5, :]
        m5 = ml[5:6, :]
        m6 = ml[6:7, :]

        rho = m0 + m1 + MINDIV
        log_rho = jnp.log(rho)
        f0 = log_rho * (1.0 / 3.0)             # log(rho^(1/3))
        rho13 = jnp.exp(f0)                    # rho^(1/3)
        r2 = rho13 * rho13
        r4 = r2 * r2                           # rho^(4/3)
        r5 = r4 * rho13                        # rho^(5/3) (= tau_unif)

        grad = m2 + 2.0 * m3 + m4
        sqrt_grad = jnp.sqrt(grad)
        tau = m5 + m6

        # One sublane-stacked reciprocal for the four shared denominators
        # (rho reused for f1 and tau_w; r5 reused for f4 and f5).
        denoms = jnp.concatenate(
            [rho, tau + MINDIV, r4 + MINDIV, r5 + MINDIV], axis=0)  # [4, TM]
        inv = 1.0 / denoms
        inv_rho = inv[0:1, :]
        inv_tau = inv[1:2, :]
        inv_r4 = inv[2:3, :]
        inv_r5 = inv[3:4, :]

        tau_w = grad * inv_rho * 0.125

        # One sublane-stacked log over the five "+1" feature arguments.
        log_args = jnp.concatenate([
            (m0 - m1) * inv_rho + 1.0,         # f1
            sqrt_grad * inv_r4 + 1.0,          # f2
            tau_w * inv_tau + 1.0,             # f3
            (tau - tau_w) * inv_r5 + 1.0,      # f4
            tau * inv_r5 + 1.0,                # f5
        ], axis=0)                             # [5, TM]
        logs = jnp.log(log_args)

        # Stack features to [8, TM]; the two extra rows hit zero weight cols.
        zeros2 = jnp.zeros_like(ml[0:2, :])
        feats8 = jnp.concatenate([f0, logs, zeros2], axis=0)       # [8, TM]

        # Layer 1 on the MXU: [h0, 8] @ [8, TM].
        z1 = jnp.dot(w1t_ref[...], feats8,
                     preferred_element_type=jnp.float32) + b1_ref[...]
        h = _sigmoid(z1.astype(compute_dtype))

        z2 = jnp.dot(w2t_ref[...].astype(compute_dtype), h,
                     preferred_element_type=jnp.float32) + b2_ref[...]
        h = _sigmoid(z2.astype(compute_dtype))

        z3 = jnp.dot(w3t_ref[...].astype(compute_dtype), h,
                     preferred_element_type=jnp.float32) + b3_ref[...]
        h = _sigmoid(z3.astype(compute_dtype)).astype(jnp.float32)

        # Last layer (h2 -> 1) as a sublane reduction (avoids an M=1 matmul).
        y = jnp.sum(w4_ref[...] * h, axis=0, keepdims=True) + b4_ref[...]
        out_ref[...] = y.astype(out_ref.dtype)

    return snn_kernel


def snn_forward(ml, params, *, tm=2048, channels_first=False, bf16_hidden=False):
    """SNN forward pass.

    ml: [N, 7] (channels_first=False) or [7, N] (channels_first=True) float32.
        Prefer channels_first=True to skip the host-side transpose HBM pass.
    params: w1..w4 as [fan_in, fan_out], b1..b4 as [1, fan_out].
    tm: lane tile (multiple of 128).  Keep >= 2 grid steps on v7x.
    bf16_hidden: bf16 tanh/matmuls for the hidden layers (v6e/v7x only; may
        exceed a 1e-4 tolerance vs an f32 reference).
    Returns [N, 1] float32.
    """
    assert tm % 128 == 0, "tile must be a multiple of 128 lanes"
    assert params["w1"].shape[0] == 6, "forward defines exactly 6 features"

    if not channels_first:
        ml = jnp.transpose(ml)                 # [7, N]
    ml = ml.astype(jnp.float32)
    n = ml.shape[1]
    n_pad = pl.cdiv(n, tm) * tm
    # Pad with 1.0 so the padded tail lanes keep every log argument positive.
    ml_t = jnp.pad(ml, ((0, 0), (0, n_pad - n)), constant_values=1.0)

    h0 = params["w1"].shape[1]
    w1t = jnp.zeros((h0, 8), jnp.float32).at[:, :6].set(
        jnp.transpose(params["w1"]))           # [h0, 8], cols 6..7 zero
    b1 = jnp.transpose(params["b1"])           # [h0, 1]
    w2t = jnp.transpose(params["w2"])          # [h1, h0]
    b2 = jnp.transpose(params["b2"])           # [h1, 1]
    w3t = jnp.transpose(params["w3"])          # [h2, h1]
    b3 = jnp.transpose(params["b3"])           # [h2, 1]
    w4 = params["w4"]                          # [h2, 1]
    b4 = jnp.transpose(params["b4"])           # [1, 1]

    def _tile_map(i):
        return (0, i)

    def _const_map(i):
        return (0, 0)

    kernel = _make_kernel(jnp.bfloat16 if bf16_hidden else jnp.float32)

    out = pl.pallas_call(
        kernel,
        out_shape=jax.ShapeDtypeStruct((1, n_pad), jnp.float32),
        grid=(n_pad // tm,),
        in_specs=[
            pl.BlockSpec((7, tm), _tile_map),
            pl.BlockSpec(w1t.shape, _const_map),
            pl.BlockSpec(b1.shape, _const_map),
            pl.BlockSpec(w2t.shape, _const_map),
            pl.BlockSpec(b2.shape, _const_map),
            pl.BlockSpec(w3t.shape, _const_map),
            pl.BlockSpec(b3.shape, _const_map),
            pl.BlockSpec(w4.shape, _const_map),
            pl.BlockSpec(b4.shape, _const_map),
        ],
        out_specs=pl.BlockSpec((1, tm), _tile_map),
        compiler_params=pltpu.CompilerParams(
            dimension_semantics=("parallel",)),
    )(ml_t, w1t, b1, w2t, b2, w3t, b3, w4, b4)

    return jnp.transpose(out[:, :n])           # [N, 1]


def init_params(key, input_dim, hidden):
    """Deterministic init mimicking nn.Linear (uniform +-1/sqrt(fan_in))."""
    dims = [input_dim] + list(hidden) + [1]
    params = {}
    for i in range(4):
        fan_in, fan_out = dims[i], dims[i + 1]
        key, kw, kb = jax.random.split(key, 3)
        bound = 1.0 / jnp.sqrt(float(fan_in))
        params[f"w{i+1}"] = jax.random.uniform(
            kw, (fan_in, fan_out), jnp.float32, -bound, bound)
        params[f"b{i+1}"] = jax.random.uniform(
            kb, (1, fan_out), jnp.float32, -bound, bound)
    return params


def snn_reference(ml_in, params):
    """Pure-JAX mirror of the PyTorch forward (ml_in: [N, 7])."""
    m = [ml_in[:, i] for i in range(7)]
    rho13 = jnp.power(m[0] + m[1] + MINDIV, 1.0 / 3.0)
    grad = m[2] + 2.0 * m[3] + m[4]
    tau = m[5] + m[6]
    tau_w = grad / ((m[0] + m[1] + MINDIV) * 8.0)
    tau_unif = jnp.power(rho13, 5.0)
    feats = jnp.stack([
        jnp.log(rho13),
        jnp.log((m[0] - m[1]) / (m[1] + m[0] + MINDIV) + 1.0),
        jnp.log(jnp.power(grad, 0.5) / (jnp.power(rho13, 4.0) + MINDIV) + 1.0),
        jnp.log(tau_w / (tau + MINDIV) + 1.0),
        jnp.log((tau - tau_w) / (tau_unif + MINDIV) + 1.0),
        jnp.log(tau / (tau_unif + MINDIV) + 1.0),
    ], axis=1)
    h = jax.nn.sigmoid(feats @ params["w1"] + params["b1"])
    h = jax.nn.sigmoid(h @ params["w2"] + params["b2"])
    h = jax.nn.sigmoid(h @ params["w3"] + params["b3"])
    return h @ params["w4"] + params["b4"]


if __name__ == "__main__":
    key = jax.random.PRNGKey(0)
    k_par, k_m, k_t = jax.random.split(key, 3)

    N = 3000              # not a multiple of the tile -> exercises padding
    INPUT_DIM = 6         # forward fills inputs[:, 0..5]
    HIDDEN = (32, 32, 32)
    TM = 1024             # 3 grid steps; default for large N is 2048

    # Physically consistent inputs (channels-first [7, N], no host transpose):
    # densities/gradients positive and tau = m5 + m6 >= tau_w so every log
    # argument in the forward is positive (the i.i.d. draw used previously can
    # violate this and makes both kernel and reference NaN).
    m04 = jax.random.uniform(k_m, (5, N), jnp.float32, 0.05, 2.0)
    rho = m04[0] + m04[1] + MINDIV
    grad = m04[2] + 2.0 * m04[3] + m04[4]
    tau_w = grad / (8.0 * rho)
    kin = jax.random.uniform(k_t, (2, N), jnp.float32, 0.05, 1.0)
    m56 = 0.5 * tau_w[None, :] + kin
    ml_cf = jnp.concatenate([m04, m56], axis=0)        # [7, N]

    params = init_params(k_par, INPUT_DIM, HIDDEN)

    out = snn_forward(ml_cf, params, tm=TM, channels_first=True)
    out = jax.block_until_ready(out)

    ref = snn_reference(jnp.transpose(ml_cf), params)
    assert out.shape == (N, 1)
    max_diff = float(jnp.max(jnp.abs(out - ref)))
    assert jnp.allclose(out, ref, atol=1e-4, rtol=1e-4), max_diff

    print("KERNEL_OK")
</pallas_src>

<mosaic_0001>
module attributes {stable_mosaic.version = 11 : i64} {
  func.func @snn_kernel(%arg0: i32, %arg1: memref<7x1024xf32, #tpu.memory_space<vmem>>, %arg2: memref<32x8xf32, #tpu.memory_space<vmem>>, %arg3: memref<32x1xf32, #tpu.memory_space<vmem>>, %arg4: memref<32x32xf32, #tpu.memory_space<vmem>>, %arg5: memref<32x1xf32, #tpu.memory_space<vmem>>, %arg6: memref<32x32xf32, #tpu.memory_space<vmem>>, %arg7: memref<32x1xf32, #tpu.memory_space<vmem>>, %arg8: memref<32x1xf32, #tpu.memory_space<vmem>>, %arg9: memref<1x1xf32, #tpu.memory_space<vmem>>, %arg10: memref<1x1024xf32, #tpu.memory_space<vmem>>) attributes {dimension_semantics = [#tpu.dimension_semantics<parallel>], iteration_bounds = array<i64: 3>, scalar_prefetch = 0 : i64, scratch_operands = 0 : i64, tpu.core_type = #tpu.core_type<tc>, window_params = [{transform_indices = @transform_0, window_bounds = array<i64: 7, 1024>}, {pipeline_mode = #tpu.pipeline_mode<synchronous>, transform_indices = @transform_1, window_bounds = array<i64: 32, 8>}, {pipeline_mode = #tpu.pipeline_mode<synchronous>, transform_indices = @transform_2, window_bounds = array<i64: 32, 1>}, {pipeline_mode = #tpu.pipeline_mode<synchronous>, transform_indices = @transform_3, window_bounds = array<i64: 32, 32>}, {pipeline_mode = #tpu.pipeline_mode<synchronous>, transform_indices = @transform_4, window_bounds = array<i64: 32, 1>}, {pipeline_mode = #tpu.pipeline_mode<synchronous>, transform_indices = @transform_5, window_bounds = array<i64: 32, 32>}, {pipeline_mode = #tpu.pipeline_mode<synchronous>, transform_indices = @transform_6, window_bounds = array<i64: 32, 1>}, {pipeline_mode = #tpu.pipeline_mode<synchronous>, transform_indices = @transform_7, window_bounds = array<i64: 32, 1>}, {pipeline_mode = #tpu.pipeline_mode<synchronous>, transform_indices = @transform_8, window_bounds = array<i64: 1, 1>}, {transform_indices = @transform_9, window_bounds = array<i64: 1, 1024>}]} {
    %c0 = arith.constant 0 : index
    %c0_0 = arith.constant 0 : index
    %0 = vector.load %arg1[%c0, %c0_0] : memref<7x1024xf32, #tpu.memory_space<vmem>>, vector<7x1024xf32>
    %1 = vector.extract_strided_slice %0 {offsets = [0, 0], sizes = [1, 1024], strides = [1, 1]} : vector<7x1024xf32> to vector<1x1024xf32>
    %2 = vector.extract_strided_slice %0 {offsets = [1, 0], sizes = [1, 1024], strides = [1, 1]} : vector<7x1024xf32> to vector<1x1024xf32>
    %3 = vector.extract_strided_slice %0 {offsets = [2, 0], sizes = [1, 1024], strides = [1, 1]} : vector<7x1024xf32> to vector<1x1024xf32>
    %4 = vector.extract_strided_slice %0 {offsets = [3, 0], sizes = [1, 1024], strides = [1, 1]} : vector<7x1024xf32> to vector<1x1024xf32>
    %5 = vector.extract_strided_slice %0 {offsets = [4, 0], sizes = [1, 1024], strides = [1, 1]} : vector<7x1024xf32> to vector<1x1024xf32>
    %6 = vector.extract_strided_slice %0 {offsets = [5, 0], sizes = [1, 1024], strides = [1, 1]} : vector<7x1024xf32> to vector<1x1024xf32>
    %7 = vector.extract_strided_slice %0 {offsets = [6, 0], sizes = [1, 1024], strides = [1, 1]} : vector<7x1024xf32> to vector<1x1024xf32>
    %8 = arith.addf %1, %2 : vector<1x1024xf32>
    %cst = arith.constant 1.000000e-10 : f32
    %9 = vector.broadcast %cst : f32 to vector<1x1024xf32>
    %10 = arith.addf %8, %9 : vector<1x1024xf32>
    %11 = math.log %10 : vector<1x1024xf32>
    %cst_1 = arith.constant 0.333333343 : f32
    %12 = vector.broadcast %cst_1 : f32 to vector<1x1024xf32>
    %13 = arith.mulf %11, %12 : vector<1x1024xf32>
    %14 = math.exp %13 : vector<1x1024xf32>
    %15 = arith.mulf %14, %14 : vector<1x1024xf32>
    %16 = arith.mulf %15, %15 : vector<1x1024xf32>
    %17 = arith.mulf %16, %14 : vector<1x1024xf32>
    %cst_2 = arith.constant 2.000000e+00 : f32
    %18 = vector.broadcast %cst_2 : f32 to vector<1x1024xf32>
    %19 = arith.mulf %18, %4 : vector<1x1024xf32>
    %20 = arith.addf %3, %19 : vector<1x1024xf32>
    %21 = arith.addf %20, %5 : vector<1x1024xf32>
    %22 = math.sqrt %21 : vector<1x1024xf32>
    %23 = arith.addf %6, %7 : vector<1x1024xf32>
    %cst_3 = arith.constant 1.000000e-10 : f32
    %24 = vector.broadcast %cst_3 : f32 to vector<1x1024xf32>
    %25 = arith.addf %23, %24 : vector<1x1024xf32>
    %cst_4 = arith.constant 1.000000e-10 : f32
    %26 = vector.broadcast %cst_4 : f32 to vector<1x1024xf32>
    %27 = arith.addf %16, %26 : vector<1x1024xf32>
    %cst_5 = arith.constant 1.000000e-10 : f32
    %28 = vector.broadcast %cst_5 : f32 to vector<1x1024xf32>
    %29 = arith.addf %17, %28 : vector<1x1024xf32>
    %30 = tpu.concatenate %10, %25, %27, %29 in 0 : vector<1x1024xf32>, vector<1x1024xf32>, vector<1x1024xf32>, vector<1x1024xf32> -> vector<4x1024xf32>
    %cst_6 = arith.constant 1.000000e+00 : f32
    %31 = vector.broadcast %cst_6 : f32 to vector<4x1024xf32>
    %32 = arith.divf %31, %30 : vector<4x1024xf32>
    %33 = vector.extract_strided_slice %32 {offsets = [0, 0], sizes = [1, 1024], strides = [1, 1]} : vector<4x1024xf32> to vector<1x1024xf32>
    %34 = vector.extract_strided_slice %32 {offsets = [1, 0], sizes = [1, 1024], strides = [1, 1]} : vector<4x1024xf32> to vector<1x1024xf32>
    %35 = vector.extract_strided_slice %32 {offsets = [2, 0], sizes = [1, 1024], strides = [1, 1]} : vector<4x1024xf32> to vector<1x1024xf32>
    %36 = vector.extract_strided_slice %32 {offsets = [3, 0], sizes = [1, 1024], strides = [1, 1]} : vector<4x1024xf32> to vector<1x1024xf32>
    %37 = arith.mulf %21, %33 : vector<1x1024xf32>
    %cst_7 = arith.constant 1.250000e-01 : f32
    %38 = vector.broadcast %cst_7 : f32 to vector<1x1024xf32>
    %39 = arith.mulf %37, %38 : vector<1x1024xf32>
    %40 = arith.subf %1, %2 : vector<1x1024xf32>
    %41 = arith.mulf %40, %33 : vector<1x1024xf32>
    %cst_8 = arith.constant 1.000000e+00 : f32
    %42 = vector.broadcast %cst_8 : f32 to vector<1x1024xf32>
    %43 = arith.addf %41, %42 : vector<1x1024xf32>
    %44 = arith.mulf %22, %35 : vector<1x1024xf32>
    %cst_9 = arith.constant 1.000000e+00 : f32
    %45 = vector.broadcast %cst_9 : f32 to vector<1x1024xf32>
    %46 = arith.addf %44, %45 : vector<1x1024xf32>
    %47 = arith.mulf %39, %34 : vector<1x1024xf32>
    %cst_10 = arith.constant 1.000000e+00 : f32
    %48 = vector.broadcast %cst_10 : f32 to vector<1x1024xf32>
    %49 = arith.addf %47, %48 : vector<1x1024xf32>
    %50 = arith.subf %23, %39 : vector<1x1024xf32>
    %51 = arith.mulf %50, %36 : vector<1x1024xf32>
    %cst_11 = arith.constant 1.000000e+00 : f32
    %52 = vector.broadcast %cst_11 : f32 to vector<1x1024xf32>
    %53 = arith.addf %51, %52 : vector<1x1024xf32>
    %54 = arith.mulf %23, %36 : vector<1x1024xf32>
    %cst_12 = arith.constant 1.000000e+00 : f32
    %55 = vector.broadcast %cst_12 : f32 to vector<1x1024xf32>
    %56 = arith.addf %54, %55 : vector<1x1024xf32>
    %57 = tpu.concatenate %43, %46, %49, %53, %56 in 0 : vector<1x1024xf32>, vector<1x1024xf32>, vector<1x1024xf32>, vector<1x1024xf32>, vector<1x1024xf32> -> vector<5x1024xf32>
    %58 = math.log %57 : vector<5x1024xf32>
    %cst_13 = arith.constant 0.000000e+00 : f32
    %59 = vector.broadcast %cst_13 : f32 to vector<2x1024xf32>
    %60 = tpu.concatenate %13, %58, %59 in 0 : vector<1x1024xf32>, vector<5x1024xf32>, vector<2x1024xf32> -> vector<8x1024xf32>
    %c0_14 = arith.constant 0 : index
    %c0_15 = arith.constant 0 : index
    %61 = vector.load %arg2[%c0_14, %c0_15] : memref<32x8xf32, #tpu.memory_space<vmem>>, vector<32x8xf32>
    %cst_16 = arith.constant dense<0.000000e+00> : vector<32x1024xf32>
    %62 = tpu.matmul %61, %60, %cst_16 {dimension_numbers = #tpu.dot_dimension_numbers<[1], [0], [0], [1], [0, 0, 1, 1], [], []>} : vector<32x8xf32>, vector<8x1024xf32>, vector<32x1024xf32> -> vector<32x1024xf32>
    %c0_17 = arith.constant 0 : index
    %c0_18 = arith.constant 0 : index
    %63 = vector.load %arg3[%c0_17, %c0_18] : memref<32x1xf32, #tpu.memory_space<vmem>>, vector<32x1xf32>
    %64 = vector.broadcast %63 : vector<32x1xf32> to vector<32x1024xf32>
    %65 = arith.addf %62, %64 : vector<32x1024xf32>
    %cst_19 = arith.constant 5.000000e-01 : f32
    %66 = vector.broadcast %cst_19 : f32 to vector<32x1024xf32>
    %67 = arith.mulf %66, %65 : vector<32x1024xf32>
    %68 = math.tanh %67 : vector<32x1024xf32>
    %cst_20 = arith.constant 5.000000e-01 : f32
    %69 = vector.broadcast %cst_20 : f32 to vector<32x1024xf32>
    %70 = arith.mulf %69, %68 : vector<32x1024xf32>
    %cst_21 = arith.constant 5.000000e-01 : f32
    %71 = vector.broadcast %cst_21 : f32 to vector<32x1024xf32>
    %72 = arith.addf %70, %71 : vector<32x1024xf32>
    %c0_22 = arith.constant 0 : index
    %c0_23 = arith.constant 0 : index
    %73 = vector.load %arg4[%c0_22, %c0_23] : memref<32x32xf32, #tpu.memory_space<vmem>>, vector<32x32xf32>
    %cst_24 = arith.constant dense<0.000000e+00> : vector<32x1024xf32>
    %74 = tpu.matmul %73, %72, %cst_24 {dimension_numbers = #tpu.dot_dimension_numbers<[1], [0], [0], [1], [0, 0, 1, 1], [], []>} : vector<32x32xf32>, vector<32x1024xf32>, vector<32x1024xf32> -> vector<32x1024xf32>
    %c0_25 = arith.constant 0 : index
    %c0_26 = arith.constant 0 : index
    %75 = vector.load %arg5[%c0_25, %c0_26] : memref<32x1xf32, #tpu.memory_space<vmem>>, vector<32x1xf32>
    %76 = vector.broadcast %75 : vector<32x1xf32> to vector<32x1024xf32>
    %77 = arith.addf %74, %76 : vector<32x1024xf32>
    %cst_27 = arith.constant 5.000000e-01 : f32
    %78 = vector.broadcast %cst_27 : f32 to vector<32x1024xf32>
    %79 = arith.mulf %78, %77 : vector<32x1024xf32>
    %80 = math.tanh %79 : vector<32x1024xf32>
    %cst_28 = arith.constant 5.000000e-01 : f32
    %81 = vector.broadcast %cst_28 : f32 to vector<32x1024xf32>
    %82 = arith.mulf %81, %80 : vector<32x1024xf32>
    %cst_29 = arith.constant 5.000000e-01 : f32
    %83 = vector.broadcast %cst_29 : f32 to vector<32x1024xf32>
    %84 = arith.addf %82, %83 : vector<32x1024xf32>
    %c0_30 = arith.constant 0 : index
    %c0_31 = arith.constant 0 : index
    %85 = vector.load %arg6[%c0_30, %c0_31] : memref<32x32xf32, #tpu.memory_space<vmem>>, vector<32x32xf32>
    %cst_32 = arith.constant dense<0.000000e+00> : vector<32x1024xf32>
    %86 = tpu.matmul %85, %84, %cst_32 {dimension_numbers = #tpu.dot_dimension_numbers<[1], [0], [0], [1], [0, 0, 1, 1], [], []>} : vector<32x32xf32>, vector<32x1024xf32>, vector<32x1024xf32> -> vector<32x1024xf32>
    %c0_33 = arith.constant 0 : index
    %c0_34 = arith.constant 0 : index
    %87 = vector.load %arg7[%c0_33, %c0_34] : memref<32x1xf32, #tpu.memory_space<vmem>>, vector<32x1xf32>
    %88 = vector.broadcast %87 : vector<32x1xf32> to vector<32x1024xf32>
    %89 = arith.addf %86, %88 : vector<32x1024xf32>
    %cst_35 = arith.constant 5.000000e-01 : f32
    %90 = vector.broadcast %cst_35 : f32 to vector<32x1024xf32>
    %91 = arith.mulf %90, %89 : vector<32x1024xf32>
    %92 = math.tanh %91 : vector<32x1024xf32>
    %cst_36 = arith.constant 5.000000e-01 : f32
    %93 = vector.broadcast %cst_36 : f32 to vector<32x1024xf32>
    %94 = arith.mulf %93, %92 : vector<32x1024xf32>
    %cst_37 = arith.constant 5.000000e-01 : f32
    %95 = vector.broadcast %cst_37 : f32 to vector<32x1024xf32>
    %96 = arith.addf %94, %95 : vector<32x1024xf32>
    %c0_38 = arith.constant 0 : index
    %c0_39 = arith.constant 0 : index
    %97 = vector.load %arg8[%c0_38, %c0_39] : memref<32x1xf32, #tpu.memory_space<vmem>>, vector<32x1xf32>
    %98 = vector.broadcast %97 : vector<32x1xf32> to vector<32x1024xf32>
    %99 = arith.mulf %98, %96 : vector<32x1024xf32>
    %cst_40 = arith.constant dense<0.000000e+00> : vector<1024xf32>
    %100 = vector.multi_reduction <add>, %99, %cst_40 [0] : vector<32x1024xf32> to vector<1024xf32>
    %101 = vector.shape_cast %100 : vector<1024xf32> to vector<1x1024xf32>
    %c0_41 = arith.constant 0 : index
    %c0_42 = arith.constant 0 : index
    %102 = vector.load %arg9[%c0_41, %c0_42] : memref<1x1xf32, #tpu.memory_space<vmem>>, vector<1x1xf32>
    %103 = vector.broadcast %102 : vector<1x1xf32> to vector<1x1024xf32>
    %104 = arith.addf %101, %103 : vector<1x1024xf32>
    %c0_43 = arith.constant 0 : index
    %c0_44 = arith.constant 0 : index
    %105 = vector.load %arg10[%c0_43, %c0_44] : memref<1x1024xf32, #tpu.memory_space<vmem>>, vector<1x1024xf32>
    tpu.vector_store %arg10[%c0_43, %c0_44], %104 {strides = array<i32>} : memref<1x1024xf32, #tpu.memory_space<vmem>>, vector<1x1024xf32>,
    return
  }
  func.func @transform_0(%arg0: i32) -> (i32, i32) {
    %c0_i32 = arith.constant 0 : i32
    %c0_i32_0 = arith.constant 0 : i32
    return %c0_i32, %arg0 : i32, i32
  }
  func.func @transform_1(%arg0: i32) -> (i32, i32) {
    %c0_i32 = arith.constant 0 : i32
    %c0_i32_0 = arith.constant 0 : i32
    %c0_i32_1 = arith.constant 0 : i32
    return %c0_i32, %c0_i32_0 : i32, i32
  }
  func.func @transform_2(%arg0: i32) -> (i32, i32) {
    %c0_i32 = arith.constant 0 : i32
    %c0_i32_0 = arith.constant 0 : i32
    %c0_i32_1 = arith.constant 0 : i32
    return %c0_i32, %c0_i32_0 : i32, i32
  }
  func.func @transform_3(%arg0: i32) -> (i32, i32) {
    %c0_i32 = arith.constant 0 : i32
    %c0_i32_0 = arith.constant 0 : i32
    %c0_i32_1 = arith.constant 0 : i32
    return %c0_i32, %c0_i32_0 : i32, i32
  }
  func.func @transform_4(%arg0: i32) -> (i32, i32) {
    %c0_i32 = arith.constant 0 : i32
    %c0_i32_0 = arith.constant 0 : i32
    %c0_i32_1 = arith.constant 0 : i32
    return %c0_i32, %c0_i32_0 : i32, i32
  }
  func.func @transform_5(%arg0: i32) -> (i32, i32) {
    %c0_i32 = arith.constant 0 : i32
    %c0_i32_0 = arith.constant 0 : i32
    %c0_i32_1 = arith.constant 0 : i32
    return %c0_i32, %c0_i32_0 : i32, i32
  }
  func.func @transform_6(%arg0: i32) -> (i32, i32) {
    %c0_i32 = arith.constant 0 : i32
    %c0_i32_0 = arith.constant 0 : i32
    %c0_i32_1 = arith.constant 0 : i32
    return %c0_i32, %c0_i32_0 : i32, i32
  }
  func.func @transform_7(%arg0: i32) -> (i32, i32) {
    %c0_i32 = arith.constant 0 : i32
    %c0_i32_0 = arith.constant 0 : i32
    %c0_i32_1 = arith.constant 0 : i32
    return %c0_i32, %c0_i32_0 : i32, i32
  }
  func.func @transform_8(%arg0: i32) -> (i32, i32) {
    %c0_i32 = arith.constant 0 : i32
    %c0_i32_0 = arith.constant 0 : i32
    %c0_i32_1 = arith.constant 0 : i32
    return %c0_i32, %c0_i32_0 : i32, i32
  }
  func.func @transform_9(%arg0: i32) -> (i32, i32) {
    %c0_i32 = arith.constant 0 : i32
    %c0_i32_0 = arith.constant 0 : i32
    return %c0_i32, %arg0 : i32, i32
  }
}

</mosaic_0001>

<llo_original>
// kernel: tpu_custom_call.1
$region0: #{tpu_custom_call.1}
  #allocation0 [shape = 'u32[]', space=smem, size = 0x4, offset = 0x4, fixed_abs, tag = 'smem constant byte address 0x4 - core index']
  #allocation1 [shape = 'u32[144,128]{1,0:T(1,128)}', space=vmem, size = 0x12000, scoped, tag = 'internal scratch']
  #allocation2 [shape = 'f32[1,1]{1,0:T(1,128)S(1)}', space=vmem, size = 0x200, scoped, tag = 'scoped memory for tpu_custom_call.1']
  %s0 = inlined_call_operand.hbm [shape: f32[7,3072], index: 0, kind: input, shape index: {}]
  %s1 = inlined_call_operand.vmem [shape: f32[32,8], index: 1, kind: input, shape index: {}]
  %s2 = inlined_call_operand.vmem [shape: f32[32,1], index: 2, kind: input, shape index: {}]
  %s3 = inlined_call_operand.vmem [shape: f32[32,32], index: 3, kind: input, shape index: {}]
  %s4 = inlined_call_operand.vmem [shape: f32[32,1], index: 4, kind: input, shape index: {}]
  %s5 = inlined_call_operand.vmem [shape: f32[32,32], index: 5, kind: input, shape index: {}]
  %s6 = inlined_call_operand.vmem [shape: f32[32,1], index: 6, kind: input, shape index: {}]
  %s7 = inlined_call_operand.vmem [shape: f32[32,1], index: 7, kind: input, shape index: {}]
  %s8 = inlined_call_operand.<no memory space> [shape: f32[1,1], index: 8, kind: input, shape index: {}]
  %s9 = inlined_call_operand.hbm [shape: f32[1,3072], index: 9, kind: output, shape index: {}]
  %s10 = sld [smem:[#allocation0]]
  $region73: #{tpu_custom_call.1} parent=0
    _
  %s12 = ssub.s32 1, %s10
  %s13 = scalar_select 0, %s12, %s10
  %v14 = vstv %s8
  %15 = vst [vmem:[#allocation2] sm:$0x1] %v14
  $region1: #{tpu_custom_call.1} parent=0
    #allocation3 [shape = 'u8[65536]{0}', space=vmem, size = 0x10000, scoped, tag = 'input window, operand 0']
    #allocation4 [shape = 's32[2]{0}', space=sflag, size = 0x8, scoped, tag = 'scoped memory for tpu_custom_call.1']
    #allocation5 [shape = 's32[2]{0}', space=sflag, size = 0x8, scoped, tag = 'scoped memory for tpu_custom_call.1']
    #allocation6 [shape = 'u8[8192]{0}', space=vmem, size = 0x2000, scoped, tag = 'output window, operand 0']
    %16 = vsyncpa [#allocation4], 0
    %s17 = scalar_lea.sflag [#allocation4], 1
    %18 = vsyncpa %s17, 0
    %19 = vsyncpa [#allocation5], 0
    %s20 = scalar_lea.sflag [#allocation5], 1
    %21 = vsyncpa %s20, 0
    loop: start=0, step=1, limit=5
    $region2: #{tpu_custom_call.1} parent=1 // loop_pre_header
      _
    $region3: #{tpu_custom_call.1} parent=1 // loop_header
      %s23 = sphi 0, %s27
      %p24 = scmp.ge.s32.totalorder %s23, 5
      %s33 = sphi 0, %s35
      %s36 = sphi 0, %s33
      %s37 = sphi 0, %s36
      %s53 = sphi 0, %s37
      %s57 = sphi 0, %s57
      %s59 = sphi 0, %s57
      %s60 = sphi 0, %s59
      %s74 = sphi 0, %s60
      %s78 = sphi 0, %s78
      %s80 = sphi 0, %s78
      %s81 = sphi 0, %s80
      %s95 = sphi 0, %s81
      %s99 = sphi 0, %s99
      %s101 = sphi 0, %s99
      %s102 = sphi 0, %s101
      %s116 = sphi 0, %s102
      %s120 = sphi 0, %s120
      %s122 = sphi 0, %s120
      %s123 = sphi 0, %s122
      %s137 = sphi 0, %s123
      %s141 = sphi 0, %s141
      %s143 = sphi 0, %s141
      %s144 = sphi 0, %s143
      %s158 = sphi 0, %s144
      %s162 = sphi 0, %s162
      %s164 = sphi 0, %s162
      %s165 = sphi 0, %s164
      %s179 = sphi 0, %s165
      %s183 = sphi 0, %s183
      %s185 = sphi 0, %s183
      %s186 = sphi 0, %s185
      %s200 = sphi 0, %s186
      %s204 = sphi 0, %s204
      %s206 = sphi 0, %s204
      %s207 = sphi 0, %s206
      %s221 = sphi 0, %s207
      %s227 = sphi 0, %s229
      %s230 = sphi 0, %s227
      %s231 = sphi 0, %s230
      %s247 = sphi 0, %s231
    $region4: #{tpu_custom_call.1} parent=1 // loop_header_branch
      %26 = sbr.rel (%p24) target = $region8
    $region5: #{tpu_custom_call.1} parent=1 // loop_body
      %s28 = ssub.s32 %s23, 1
      %s29 = ssub.s32 %s23, 2
      %s30 = sadd.s32 %s23, 1
      %s31 = ssub.s32 %s23, %s30
      %p32 = scmp.eq.s32.totalorder %s31, 0
      %s34 = sadd.s32 %s33, 1
      %s35 = scalar_select %p32, %s33, %s34
      %p38 = pneg %p32
      %p39 = scmp.eq.s32.totalorder %s23, 2
      %p40 = por %p38, %p39
      %p41 = scmp.ne.s32.totalorder %s33, %s36
      %p42 = scmp.eq.s32.totalorder %s23, 0
      %p43 = por %p41, %p42
      %p44 = scmp.ne.s32.totalorder %s33, %s36
      %p45 = scmp.eq.s32.totalorder %s28, 2
      %p46 = por %p44, %p45
      %p47 = scmp.ne.s32.totalorder %s36, %s37
      %p48 = scmp.eq.s32.totalorder %s28, 0
      %p49 = por %p47, %p48
      %p50 = scmp.ne.s32.totalorder %s36, %s37
      %p51 = scmp.eq.s32.totalorder %s29, 2
      %p52 = por %p50, %p51
      %p54 = scmp.ne.s32.totalorder %s37, %s53
      %p55 = scmp.eq.s32.totalorder %s29, 0
      %p56 = por %p54, %p55
      %s58 = sadd.s32 %s57, 1
      %p61 = scmp.eq.s32.totalorder %s23, 2
      %p62 = scmp.ne.s32.totalorder %s57, %s59
      %p63 = scmp.eq.s32.totalorder %s23, 0
      %p64 = por %p62, %p63
      %p65 = scmp.ne.s32.totalorder %s57, %s59
      %p66 = scmp.eq.s32.totalorder %s28, 2
      %p67 = por %p65, %p66
      %p68 = scmp.ne.s32.totalorder %s59, %s60
      %p69 = scmp.eq.s32.totalorder %s28, 0
      %p70 = por %p68, %p69
      %p71 = scmp.ne.s32.totalorder %s59, %s60
      %p72 = scmp.eq.s32.totalorder %s29, 2
      %p73 = por %p71, %p72
      %p75 = scmp.ne.s32.totalorder %s60, %s74
      %p76 = scmp.eq.s32.totalorder %s29, 0
      %p77 = por %p75, %p76
      %s79 = sadd.s32 %s78, 1
      %p82 = scmp.eq.s32.totalorder %s23, 2
      %p83 = scmp.ne.s32.totalorder %s78, %s80
      %p84 = scmp.eq.s32.totalorder %s23, 0
      %p85 = por %p83, %p84
      %p86 = scmp.ne.s32.totalorder %s78, %s80
      %p87 = scmp.eq.s32.totalorder %s28, 2
      %p88 = por %p86, %p87
      %p89 = scmp.ne.s32.totalorder %s80, %s81
      %p90 = scmp.eq.s32.totalorder %s28, 0
      %p91 = por %p89, %p90
      %p92 = scmp.ne.s32.totalorder %s80, %s81
      %p93 = scmp.eq.s32.totalorder %s29, 2
      %p94 = por %p92, %p93
      %p96 = scmp.ne.s32.totalorder %s81, %s95
      %p97 = scmp.eq.s32.totalorder %s29, 0
      %p98 = por %p96, %p97
      %s100 = sadd.s32 %s99, 1
      %p103 = scmp.eq.s32.totalorder %s23, 2
      %p104 = scmp.ne.s32.totalorder %s99, %s101
      %p105 = scmp.eq.s32.totalorder %s23, 0
      %p106 = por %p104, %p105
      %p107 = scmp.ne.s32.totalorder %s99, %s101
      %p108 = scmp.eq.s32.totalorder %s28, 2
      %p109 = por %p107, %p108
      %p110 = scmp.ne.s32.totalorder %s101, %s102
      %p111 = scmp.eq.s32.totalorder %s28, 0
      %p112 = por %p110, %p111
      %p113 = scmp.ne.s32.totalorder %s101, %s102
      %p114 = scmp.eq.s32.totalorder %s29, 2
      %p115 = por %p113, %p114
      %p117 = scmp.ne.s32.totalorder %s102, %s116
      %p118 = scmp.eq.s32.totalorder %s29, 0
      %p119 = por %p117, %p118
      %s121 = sadd.s32 %s120, 1
      %p124 = scmp.eq.s32.totalorder %s23, 2
      %p125 = scmp.ne.s32.totalorder %s120, %s122
      %p126 = scmp.eq.s32.totalorder %s23, 0
      %p127 = por %p125, %p126
      %p128 = scmp.ne.s32.totalorder %s120, %s122
      %p129 = scmp.eq.s32.totalorder %s28, 2
      %p130 = por %p128, %p129
      %p131 = scmp.ne.s32.totalorder %s122, %s123
      %p132 = scmp.eq.s32.totalorder %s28, 0
      %p133 = por %p131, %p132
      %p134 = scmp.ne.s32.totalorder %s122, %s123
      %p135 = scmp.eq.s32.totalorder %s29, 2
      %p136 = por %p134, %p135
      %p138 = scmp.ne.s32.totalorder %s123, %s137
      %p139 = scmp.eq.s32.totalorder %s29, 0
      %p140 = por %p138, %p139
      %s142 = sadd.s32 %s141, 1
      %p145 = scmp.eq.s32.totalorder %s23, 2
      %p146 = scmp.ne.s32.totalorder %s141, %s143
      %p147 = scmp.eq.s32.totalorder %s23, 0
      %p148 = por %p146, %p147
      %p149 = scmp.ne.s32.totalorder %s141, %s143
      %p150 = scmp.eq.s32.totalorder %s28, 2
      %p151 = por %p149, %p150
      %p152 = scmp.ne.s32.totalorder %s143, %s144
      %p153 = scmp.eq.s32.totalorder %s28, 0
      %p154 = por %p152, %p153
      %p155 = scmp.ne.s32.totalorder %s143, %s144
      %p156 = scmp.eq.s32.totalorder %s29, 2
      %p157 = por %p155, %p156
      %p159 = scmp.ne.s32.totalorder %s144, %s158
      %p160 = scmp.eq.s32.totalorder %s29, 0
      %p161 = por %p159, %p160
      %s163 = sadd.s32 %s162, 1
      %p166 = scmp.eq.s32.totalorder %s23, 2
      %p167 = scmp.ne.s32.totalorder %s162, %s164
      %p168 = scmp.eq.s32.totalorder %s23, 0
      %p169 = por %p167, %p168
      %p170 = scmp.ne.s32.totalorder %s162, %s164
      %p171 = scmp.eq.s32.totalorder %s28, 2
      %p172 = por %p170, %p171
      %p173 = scmp.ne.s32.totalorder %s164, %s165
      %p174 = scmp.eq.s32.totalorder %s28, 0
      %p175 = por %p173, %p174
      %p176 = scmp.ne.s32.totalorder %s164, %s165
      %p177 = scmp.eq.s32.totalorder %s29, 2
      %p178 = por %p176, %p177
      %p180 = scmp.ne.s32.totalorder %s165, %s179
      %p181 = scmp.eq.s32.totalorder %s29, 0
      %p182 = por %p180, %p181
      %s184 = sadd.s32 %s183, 1
      %p187 = scmp.eq.s32.totalorder %s23, 2
      %p188 = scmp.ne.s32.totalorder %s183, %s185
      %p189 = scmp.eq.s32.totalorder %s23, 0
      %p190 = por %p188, %p189
      %p191 = scmp.ne.s32.totalorder %s183, %s185
      %p192 = scmp.eq.s32.totalorder %s28, 2
      %p193 = por %p191, %p192
      %p194 = scmp.ne.s32.totalorder %s185, %s186
      %p195 = scmp.eq.s32.totalorder %s28, 0
      %p196 = por %p194, %p195
      %p197 = scmp.ne.s32.totalorder %s185, %s186
      %p198 = scmp.eq.s32.totalorder %s29, 2
      %p199 = por %p197, %p198
      %p201 = scmp.ne.s32.totalorder %s186, %s200
      %p202 = scmp.eq.s32.totalorder %s29, 0
      %p203 = por %p201, %p202
      %s205 = sadd.s32 %s204, 1
      %p208 = scmp.eq.s32.totalorder %s23, 2
      %p209 = scmp.ne.s32.totalorder %s204, %s206
      %p210 = scmp.eq.s32.totalorder %s23, 0
      %p211 = por %p209, %p210
      %p212 = scmp.ne.s32.totalorder %s204, %s206
      %p213 = scmp.eq.s32.totalorder %s28, 2
      %p214 = por %p212, %p213
      %p215 = scmp.ne.s32.totalorder %s206, %s207
      %p216 = scmp.eq.s32.totalorder %s28, 0
      %p217 = por %p215, %p216
      %p218 = scmp.ne.s32.totalorder %s206, %s207
      %p219 = scmp.eq.s32.totalorder %s29, 2
      %p220 = por %p218, %p219
      %p222 = scmp.ne.s32.totalorder %s207, %s221
      %p223 = scmp.eq.s32.totalorder %s29, 0
      %p224 = por %p222, %p223
      %s225 = ssub.s32 %s23, %s30
      %p226 = scmp.eq.s32.totalorder %s225, 0
      %s228 = sadd.s32 %s227, 1
      %s229 = scalar_select %p226, %s227, %s228
      %p232 = pneg %p226
      %p233 = scmp.eq.s32.totalorder %s23, 2
      %p234 = por %p232, %p233
      %p235 = scmp.ne.s32.totalorder %s227, %s230
      %p236 = scmp.eq.s32.totalorder %s23, 0
      %p237 = por %p235, %p236
      %p238 = scmp.ne.s32.totalorder %s227, %s230
      %p239 = scmp.eq.s32.totalorder %s28, 2
      %p240 = por %p238, %p239
      %p241 = scmp.ne.s32.totalorder %s230, %s231
      %p242 = scmp.eq.s32.totalorder %s28, 0
      %p243 = por %p241, %p242
      %p244 = scmp.ne.s32.totalorder %s230, %s231
      %p245 = scmp.eq.s32.totalorder %s29, 2
      %p246 = por %p244, %p245
      %p248 = scmp.ne.s32.totalorder %s231, %s247
      %p249 = scmp.eq.s32.totalorder %s29, 0
      %p250 = por %p248, %p249
      %p251 = scmp.le.s32.totalorder 1, %s23
      %p252 = scmp.lt.s32.totalorder %s23, 4
      %p253 = pnand %p251, %p252
      %p254 = pneg %p253
      // Predicated region
      $region9: #{tpu_custom_call.1} parent=5 // pred_check
        _
      $region10: #{tpu_custom_call.1} parent=5 // pred_check_branch
        %256 = sbr.rel (%p253) target = $region12
      $region11: #{tpu_custom_call.1} parent=5 // pred_region
        %s257 = ssub.s32 %s23, 1
        // Predicated region
        $region13: #{tpu_custom_call.1} parent=11 // pred_check
          %p258 = pneg %p70
        $region14: #{tpu_custom_call.1} parent=11 // pred_check_branch
          %260 = sbr.rel (%p258) target = $region16
        $region15: #{tpu_custom_call.1} parent=11 // pred_region
          _
        $region16: #{tpu_custom_call.1} parent=11 // pred_fallthru
          _
        // Predicated region
        $region17: #{tpu_custom_call.1} parent=11 // pred_check
          %p261 = pneg %p91
        $region18: #{tpu_custom_call.1} parent=11 // pred_check_branch
          %263 = sbr.rel (%p261) target = $region20
        $region19: #{tpu_custom_call.1} parent=11 // pred_region
          _
        $region20: #{tpu_custom_call.1} parent=11 // pred_fallthru
          _
        // Predicated region
        $region21: #{tpu_custom_call.1} parent=11 // pred_check
          %p264 = pneg %p112
        $region22: #{tpu_custom_call.1} parent=11 // pred_check_branch
          %266 = sbr.rel (%p264) target = $region24
        $region23: #{tpu_custom_call.1} parent=11 // pred_region
          _
        $region24: #{tpu_custom_call.1} parent=11 // pred_fallthru
          _
        // Predicated region
        $region25: #{tpu_custom_call.1} parent=11 // pred_check
          %p267 = pneg %p133
        $region26: #{tpu_custom_call.1} parent=11 // pred_check_branch
          %269 = sbr.rel (%p267) target = $region28
        $region27: #{tpu_custom_call.1} parent=11 // pred_region
          _
        $region28: #{tpu_custom_call.1} parent=11 // pred_fallthru
          _
        // Predicated region
        $region29: #{tpu_custom_call.1} parent=11 // pred_check
          %p270 = pneg %p154
        $region30: #{tpu_custom_call.1} parent=11 // pred_check_branch
          %272 = sbr.rel (%p270) target = $region32
        $region31: #{tpu_custom_call.1} parent=11 // pred_region
          _
        $region32: #{tpu_custom_call.1} parent=11 // pred_fallthru
          _
        // Predicated region
        $region33: #{tpu_custom_call.1} parent=11 // pred_check
          %p273 = pneg %p175
        $region34: #{tpu_custom_call.1} parent=11 // pred_check_branch
          %275 = sbr.rel (%p273) target = $region36
        $region35: #{tpu_custom_call.1} parent=11 // pred_region
          _
        $region36: #{tpu_custom_call.1} parent=11 // pred_fallthru
          _
        // Predicated region
        $region37: #{tpu_custom_call.1} parent=11 // pred_check
          %p276 = pneg %p196
        $region38: #{tpu_custom_call.1} parent=11 // pred_check_branch
          %278 = sbr.rel (%p276) target = $region40
        $region39: #{tpu_custom_call.1} parent=11 // pred_region
          _
        $region40: #{tpu_custom_call.1} parent=11 // pred_fallthru
          _
        // Predicated region
        $region41: #{tpu_custom_call.1} parent=11 // pred_check
          %p279 = pneg %p217
        $region42: #{tpu_custom_call.1} parent=11 // pred_check_branch
          %281 = sbr.rel (%p279) target = $region44
        $region43: #{tpu_custom_call.1} parent=11 // pred_region
          _
        $region44: #{tpu_custom_call.1} parent=11 // pred_fallthru
          _
      $region12: #{tpu_custom_call.1} parent=5 // pred_fallthru
        _
      %p282 = scmp.lt.s32.totalorder %s23, 3
      // Predicated region
      $region45: #{tpu_custom_call.1} parent=5 // pred_check
        %p283 = pneg %p282
      $region46: #{tpu_custom_call.1} parent=5 // pred_check_branch
        %285 = sbr.rel (%p283) target = $region48
      $region47: #{tpu_custom_call.1} parent=5 // pred_region
        // Predicated region
        $region49: #{tpu_custom_call.1} parent=47 // pred_check
          %p286 = pneg %p43
        $region50: #{tpu_custom_call.1} parent=47 // pred_check_branch
          %288 = sbr.rel (%p286) target = $region52
        $region51: #{tpu_custom_call.1} parent=47 // pred_region
          %s289 = sand.u32 %s33, 1
          %s290 = scalar_lea.sflag [#allocation4], %s289
          %s291 = sand.u32 %s33, 1
          %s292 = smul.addr %s291, 64
          %s293 = scalar_lea.vmem [#allocation3], %s292
          %s294 = smul.u32 8, %s23
          %s296 = ssub.s32 1024, 1024
          %297 = vsyncadd %s290, %s296
          %s298 = smul.addr %s294, 128
          %s299 = scalar_lea.hbm %s0, %s298
          %s301 = sshll.u32 %s293, 4
          %s302 = int_to_ptr.vmem [resolvable:$true] %s301
          %304 = dma.hbm_to_vmem [thread:$0]  %s299, 1024, %s302, %s290
        $region52: #{tpu_custom_call.1} parent=47 // pred_fallthru
          _
      $region48: #{tpu_custom_call.1} parent=5 // pred_fallthru
        _
      %p305 = scmp.le.s32.totalorder 1, %s23
      %p306 = scmp.lt.s32.totalorder %s23, 4
      %p307 = pnand %p305, %p306
      %p308 = pneg %p307
      // Predicated region
      $region53: #{tpu_custom_call.1} parent=5 // pred_check
        _
      $region54: #{tpu_custom_call.1} parent=5 // pred_check_branch
        %310 = sbr.rel (%p307) target = $region56
      $region55: #{tpu_custom_call.1} parent=5 // pred_region
        %s311 = ssub.s32 %s23, 1
        %s312 = sand.u32 %s36, 1
        %s313 = scalar_lea.sflag [#allocation4], %s312
        %s314 = sand.u32 %s36, 1
        %s315 = smul.addr %s314, 64
        %s316 = scalar_lea.vmem [#allocation3], %s315
        // Predicated region
        $region57: #{tpu_custom_call.1} parent=55 // pred_check
          %p317 = pneg %p49
        $region58: #{tpu_custom_call.1} parent=55 // pred_check_branch
          %319 = sbr.rel (%p317) target = $region60
        $region59: #{tpu_custom_call.1} parent=55 // pred_region
          %320 = dma.done %s313, 1024
        $region60: #{tpu_custom_call.1} parent=55 // pred_fallthru
          _
        %s321 = sand.u32 %s36, 1
        %s322 = scalar_lea.sflag [#allocation4], %s321
        %s323 = sand.u32 %s36, 1
        %s324 = smul.addr %s323, 64
        %s325 = scalar_lea.vmem [#allocation3], %s324
        %p326 = pneg %p49
        %p327 = pneg %p46
        %p328 = pneg %p70
        %p329 = pneg %p67
        %p330 = pneg %p91
        %p331 = pneg %p88
        %p332 = pneg %p112
        %p333 = pneg %p109
        %p334 = pneg %p133
        %p335 = pneg %p130
        %p336 = pneg %p154
        %p337 = pneg %p151
        %p338 = pneg %p175
        %p339 = pneg %p172
        %p340 = pneg %p196
        %p341 = pneg %p193
        %p342 = pneg %p217
        %p343 = pneg %p214
        %p344 = pneg %p243
        %p345 = pneg %p240
        %s346 = sand.u32 %s230, 1
        %s347 = scalar_lea.sflag [#allocation5], %s346
        %s348 = sand.u32 %s230, 1
        %s349 = smul.addr %s348, 8
        %s350 = scalar_lea.vmem [#allocation6], %s349
        %s351 = smul.u32 8, %s28
        %s352 = smul.u32 8, %s28
        %v353 = vld [vmem:[%s316] sm:$0x7f]
        %v354 = vld [vmem:[%s316 + $0x8] sm:$0x7f]
        %v355 = vld [vmem:[%s316 + $0x10] sm:$0x7f]
        %v356 = vld [vmem:[%s316 + $0x18] sm:$0x7f]
        %v357 = vld [vmem:[%s316 + $0x20] sm:$0x7f]
        %v358 = vld [vmem:[%s316 + $0x28] sm:$0x7f]
        %v359 = vld [vmem:[%s316 + $0x30] sm:$0x7f]
        %v360 = vld [vmem:[%s316 + $0x38] sm:$0x7f]
        %v369 = vrot.slane %v353, 1
        %v370 = vrot.slane %v354, 1
        %v371 = vrot.slane %v355, 1
        %v372 = vrot.slane %v356, 1
        %v373 = vrot.slane %v357, 1
        %v374 = vrot.slane %v358, 1
        %v375 = vrot.slane %v359, 1
        %v376 = vrot.slane %v360, 1
        %v385 = vadd.f32 %v353, %v369
        %v386 = vadd.f32 %v354, %v370
        %v387 = vadd.f32 %v355, %v371
        %v388 = vadd.f32 %v356, %v372
        %v389 = vadd.f32 %v357, %v373
        %v390 = vadd.f32 %v358, %v374
        %v391 = vadd.f32 %v359, %v375
        %v392 = vadd.f32 %v360, %v376
        %v393 = vadd.f32 %v385, 1e-10
        %v394 = vadd.f32 %v386, 1e-10
        %v395 = vadd.f32 %v387, 1e-10
        %v396 = vadd.f32 %v388, 1e-10
        %v397 = vadd.f32 %v389, 1e-10
        %v398 = vadd.f32 %v390, 1e-10
        %v399 = vadd.f32 %v391, 1e-10
        %v400 = vadd.f32 %v392, 1e-10
        %v401 = vlog2.pop %v393
        %v402 = vmul.f32 %v401, 0.6931472
        %v403 = vlog2.pop %v394
        %v404 = vmul.f32 %v403, 0.6931472
        %v405 = vlog2.pop %v395
        %v406 = vmul.f32 %v405, 0.6931472
        %v407 = vlog2.pop %v396
        %v408 = vmul.f32 %v407, 0.6931472
        %v409 = vlog2.pop %v397
        %v410 = vmul.f32 %v409, 0.6931472
        %v411 = vlog2.pop %v398
        %v412 = vmul.f32 %v411, 0.6931472
        %v413 = vlog2.pop %v399
        %v414 = vmul.f32 %v413, 0.6931472
        %v415 = vlog2.pop %v400
        %v416 = vmul.f32 %v415, 0.6931472
        %v417 = vmul.f32 %v402, 0.33333334
        %v418 = vmul.f32 %v404, 0.33333334
        %v419 = vmul.f32 %v406, 0.33333334
        %v420 = vmul.f32 %v408, 0.33333334
        %v421 = vmul.f32 %v410, 0.33333334
        %v422 = vmul.f32 %v412, 0.33333334
        %v423 = vmul.f32 %v414, 0.33333334
        %v424 = vmul.f32 %v416, 0.33333334
        %v425 = vmul.f32 %v417, 1.442695
        %v426 = vpow.pop %v425
        %v427 = vmul.f32 %v418, 1.442695
        %v428 = vpow.pop %v427
        %v429 = vmul.f32 %v419, 1.442695
        %v430 = vpow.pop %v429
        %v431 = vmul.f32 %v420, 1.442695
        %v432 = vpow.pop %v431
        %v433 = vmul.f32 %v421, 1.442695
        %v434 = vpow.pop %v433
        %v435 = vmul.f32 %v422, 1.442695
        %v436 = vpow.pop %v435
        %v437 = vmul.f32 %v423, 1.442695
        %v438 = vpow.pop %v437
        %v439 = vmul.f32 %v424, 1.442695
        %v440 = vpow.pop %v439
        %v441 = vmul.f32 %v426, %v426
        %v442 = vmul.f32 %v428, %v428
        %v443 = vmul.f32 %v430, %v430
        %v444 = vmul.f32 %v432, %v432
        %v445 = vmul.f32 %v434, %v434
        %v446 = vmul.f32 %v436, %v436
        %v447 = vmul.f32 %v438, %v438
        %v448 = vmul.f32 %v440, %v440
        %v449 = vmul.f32 %v441, %v441
        %v450 = vmul.f32 %v442, %v442
        %v451 = vmul.f32 %v443, %v443
        %v452 = vmul.f32 %v444, %v444
        %v453 = vmul.f32 %v445, %v445
        %v454 = vmul.f32 %v446, %v446
        %v455 = vmul.f32 %v447, %v447
        %v456 = vmul.f32 %v448, %v448
        %v457 = vmul.f32 %v449, %v426
        %v458 = vmul.f32 %v450, %v428
        %v459 = vmul.f32 %v451, %v430
        %v460 = vmul.f32 %v452, %v432
        %v461 = vmul.f32 %v453, %v434
        %v462 = vmul.f32 %v454, %v436
        %v463 = vmul.f32 %v455, %v438
        %v464 = vmul.f32 %v456, %v440
        %v465 = vmul.f32 %v353, 2.0
        %v466 = vmul.f32 %v354, 2.0
        %v467 = vmul.f32 %v355, 2.0
        %v468 = vmul.f32 %v356, 2.0
        %v469 = vmul.f32 %v357, 2.0
        %v470 = vmul.f32 %v358, 2.0
        %v471 = vmul.f32 %v359, 2.0
        %v472 = vmul.f32 %v360, 2.0
        %v481 = vrot.slane %v465, 1
        %v482 = vrot.slane %v466, 1
        %v483 = vrot.slane %v467, 1
        %v484 = vrot.slane %v468, 1
        %v485 = vrot.slane %v469, 1
        %v486 = vrot.slane %v470, 1
        %v487 = vrot.slane %v471, 1
        %v488 = vrot.slane %v472, 1
        %v497 = vadd.f32 %v353, %v481
        %v498 = vadd.f32 %v354, %v482
        %v499 = vadd.f32 %v355, %v483
        %v500 = vadd.f32 %v356, %v484
        %v501 = vadd.f32 %v357, %v485
        %v502 = vadd.f32 %v358, %v486
        %v503 = vadd.f32 %v359, %v487
        %v504 = vadd.f32 %v360, %v488
        %v505 = vrot.slane %v353, 2
        %v506 = vrot.slane %v354, 2
        %v507 = vrot.slane %v355, 2
        %v508 = vrot.slane %v356, 2
        %v509 = vrot.slane %v357, 2
        %v510 = vrot.slane %v358, 2
        %v511 = vrot.slane %v359, 2
        %v512 = vrot.slane %v360, 2
        %v521 = vadd.f32 %v497, %v505
        %v522 = vadd.f32 %v498, %v506
        %v523 = vadd.f32 %v499, %v507
        %v524 = vadd.f32 %v500, %v508
        %v525 = vadd.f32 %v501, %v509
        %v526 = vadd.f32 %v502, %v510
        %v527 = vadd.f32 %v503, %v511
        %v528 = vadd.f32 %v504, %v512
        %v529 = vrsqrt.pop %v521
        %v530 = vmul.f32 %v521, %v529
        %vm531 = vcmp.eq.f32.partialorder %v521, inf
        %v532 = vsel %vm531, %v521, %v530
        %vm533 = vcmp.eq.f32.partialorder %v521, 0.0
        %v534 = vand.u32 %v521, 2147483648
        %v535 = vsel %vm533, %v534, %v532
        %v536 = vrsqrt.pop %v522
        %v537 = vmul.f32 %v522, %v536
        %vm538 = vcmp.eq.f32.partialorder %v522, inf
        %v539 = vsel %vm538, %v522, %v537
        %vm540 = vcmp.eq.f32.partialorder %v522, 0.0
        %v541 = vand.u32 %v522, 2147483648
        %v542 = vsel %vm540, %v541, %v539
        %v543 = vrsqrt.pop %v523
        %v544 = vmul.f32 %v523, %v543
        %vm545 = vcmp.eq.f32.partialorder %v523, inf
        %v546 = vsel %vm545, %v523, %v544
        %vm547 = vcmp.eq.f32.partialorder %v523, 0.0
        %v548 = vand.u32 %v523, 2147483648
        %v549 = vsel %vm547, %v548, %v546
        %v550 = vrsqrt.pop %v524
        %v551 = vmul.f32 %v524, %v550
        %vm552 = vcmp.eq.f32.partialorder %v524, inf
        %v553 = vsel %vm552, %v524, %v551
        %vm554 = vcmp.eq.f32.partialorder %v524, 0.0
        %v555 = vand.u32 %v524, 2147483648
        %v556 = vsel %vm554, %v555, %v553
        %v557 = vrsqrt.pop %v525
        %v558 = vmul.f32 %v525, %v557
        %vm559 = vcmp.eq.f32.partialorder %v525, inf
        %v560 = vsel %vm559, %v525, %v558
        %vm561 = vcmp.eq.f32.partialorder %v525, 0.0
        %v562 = vand.u32 %v525, 2147483648
        %v563 = vsel %vm561, %v562, %v560
        %v564 = vrsqrt.pop %v526
        %v565 = vmul.f32 %v526, %v564
        %vm566 = vcmp.eq.f32.partialorder %v526, inf
        %v567 = vsel %vm566, %v526, %v565
        %vm568 = vcmp.eq.f32.partialorder %v526, 0.0
        %v569 = vand.u32 %v526, 2147483648
        %v570 = vsel %vm568, %v569, %v567
        %v571 = vrsqrt.pop %v527
        %v572 = vmul.f32 %v527, %v571
        %vm573 = vcmp.eq.f32.partialorder %v527, inf
        %v574 = vsel %vm573, %v527, %v572
        %vm575 = vcmp.eq.f32.partialorder %v527, 0.0
        %v576 = vand.u32 %v527, 2147483648
        %v577 = vsel %vm575, %v576, %v574
        %v578 = vrsqrt.pop %v528
        %v579 = vmul.f32 %v528, %v578
        %vm580 = vcmp.eq.f32.partialorder %v528, inf
        %v581 = vsel %vm580, %v528, %v579
        %vm582 = vcmp.eq.f32.partialorder %v528, 0.0
        %v583 = vand.u32 %v528, 2147483648
        %v584 = vsel %vm582, %v583, %v581
        %v585 = vadd.f32 %v449, 1e-10
        %v586 = vadd.f32 %v450, 1e-10
        %v587 = vadd.f32 %v451, 1e-10
        %v588 = vadd.f32 %v452, 1e-10
        %v589 = vadd.f32 %v453, 1e-10
        %v590 = vadd.f32 %v454, 1e-10
        %v591 = vadd.f32 %v455, 1e-10
        %v592 = vadd.f32 %v456, 1e-10
        %v593 = vadd.f32 %v457, 1e-10
        %v594 = vadd.f32 %v458, 1e-10
        %v595 = vadd.f32 %v459, 1e-10
        %v596 = vadd.f32 %v460, 1e-10
        %v597 = vadd.f32 %v461, 1e-10
        %v598 = vadd.f32 %v462, 1e-10
        %v599 = vadd.f32 %v463, 1e-10
        %v600 = vadd.f32 %v464, 1e-10
        %v609 = vrot.slane %v393, 4
        %v610 = vrot.slane %v394, 4
        %v611 = vrot.slane %v395, 4
        %v612 = vrot.slane %v396, 4
        %v613 = vrot.slane %v397, 4
        %v614 = vrot.slane %v398, 4
        %v615 = vrot.slane %v399, 4
        %v616 = vrot.slane %v400, 4
        %v633 = vrot.slane %v585, 6
        %v634 = vrot.slane %v586, 6
        %v635 = vrot.slane %v587, 6
        %v636 = vrot.slane %v588, 6
        %v637 = vrot.slane %v589, 6
        %v638 = vrot.slane %v590, 6
        %v639 = vrot.slane %v591, 6
        %v640 = vrot.slane %v592, 6
        %v657 = vrot.slane %v593, 5
        %v658 = vrot.slane %v594, 5
        %v659 = vrot.slane %v595, 5
        %v660 = vrot.slane %v596, 5
        %v661 = vrot.slane %v597, 5
        %v662 = vrot.slane %v598, 5
        %v663 = vrot.slane %v599, 5
        %v664 = vrot.slane %v600, 5
        %vm673 = vcmask 1040384
        %v674 = vsel %vm673, %v393, %v609
        %v675 = vsel %vm673, %v394, %v610
        %v676 = vsel %vm673, %v395, %v611
        %v677 = vsel %vm673, %v396, %v612
        %v678 = vsel %vm673, %v397, %v613
        %v679 = vsel %vm673, %v398, %v614
        %v680 = vsel %vm673, %v399, %v615
        %v681 = vsel %vm673, %v400, %v616
        %vm682 = vcmask 1041408
        %v683 = vsel %vm682, %v674, %v633
        %v684 = vsel %vm682, %v675, %v634
        %v685 = vsel %vm682, %v676, %v635
        %v686 = vsel %vm682, %v677, %v636
        %v687 = vsel %vm682, %v678, %v637
        %v688 = vsel %vm682, %v679, %v638
        %v689 = vsel %vm682, %v680, %v639
        %v690 = vsel %vm682, %v681, %v640
        %vm691 = vcmask 1042432
        %v692 = vsel %vm691, %v683, %v657
        %v693 = vsel %vm691, %v684, %v658
        %v694 = vsel %vm691, %v685, %v659
        %v695 = vsel %vm691, %v686, %v660
        %v696 = vsel %vm691, %v687, %v661
        %v697 = vsel %vm691, %v688, %v662
        %v698 = vsel %vm691, %v689, %v663
        %v699 = vsel %vm691, %v690, %v664
        %v700 = vrcp.pop %v692
        %v701 = vmul.f32 1.0, %v700
        %v702 = vrcp.pop %v693
        %v703 = vmul.f32 1.0, %v702
        %v704 = vrcp.pop %v694
        %v705 = vmul.f32 1.0, %v704
        %v706 = vrcp.pop %v695
        %v707 = vmul.f32 1.0, %v706
        %v708 = vrcp.pop %v696
        %v709 = vmul.f32 1.0, %v708
        %v710 = vrcp.pop %v697
        %v711 = vmul.f32 1.0, %v710
        %v712 = vrcp.pop %v698
        %v713 = vmul.f32 1.0, %v712
        %v714 = vrcp.pop %v699
        %v715 = vmul.f32 1.0, %v714
        %v724 = vrot.slane %v701, 6
        %v725 = vrot.slane %v703, 6
        %v726 = vrot.slane %v705, 6
        %v727 = vrot.slane %v707, 6
        %v728 = vrot.slane %v709, 6
        %v729 = vrot.slane %v711, 6
        %v730 = vrot.slane %v713, 6
        %v731 = vrot.slane %v715, 6
        %v740 = vmul.f32 %v521, %v724
        %v741 = vmul.f32 %v522, %v725
        %v742 = vmul.f32 %v523, %v726
        %v743 = vmul.f32 %v524, %v727
        %v744 = vmul.f32 %v525, %v728
        %v745 = vmul.f32 %v526, %v729
        %v746 = vmul.f32 %v527, %v730
        %v747 = vmul.f32 %v528, %v731
        %v748 = vmul.f32 %v740, 0.125
        %v749 = vmul.f32 %v741, 0.125
        %v750 = vmul.f32 %v742, 0.125
        %v751 = vmul.f32 %v743, 0.125
        %v752 = vmul.f32 %v744, 0.125
        %v753 = vmul.f32 %v745, 0.125
        %v754 = vmul.f32 %v746, 0.125
        %v755 = vmul.f32 %v747, 0.125
        %v756 = vsub.f32 %v353, %v369
        %v757 = vsub.f32 %v354, %v370
        %v758 = vsub.f32 %v355, %v371
        %v759 = vsub.f32 %v356, %v372
        %v760 = vsub.f32 %v357, %v373
        %v761 = vsub.f32 %v358, %v374
        %v762 = vsub.f32 %v359, %v375
        %v763 = vsub.f32 %v360, %v376
        %v764 = vmul.f32 %v756, %v701
        %v765 = vmul.f32 %v757, %v703
        %v766 = vmul.f32 %v758, %v705
        %v767 = vmul.f32 %v759, %v707
        %v768 = vmul.f32 %v760, %v709
        %v769 = vmul.f32 %v761, %v711
        %v770 = vmul.f32 %v762, %v713
        %v771 = vmul.f32 %v763, %v715
        %v772 = vadd.f32 %v764, 1.0
        %v773 = vadd.f32 %v765, 1.0
        %v774 = vadd.f32 %v766, 1.0
        %v775 = vadd.f32 %v767, 1.0
        %v776 = vadd.f32 %v768, 1.0
        %v777 = vadd.f32 %v769, 1.0
        %v778 = vadd.f32 %v770, 1.0
        %v779 = vadd.f32 %v771, 1.0
        %v780 = vmul.f32 %v535, %v701
        %v781 = vmul.f32 %v542, %v703
        %v782 = vmul.f32 %v549, %v705
        %v783 = vmul.f32 %v556, %v707
        %v784 = vmul.f32 %v563, %v709
        %v785 = vmul.f32 %v570, %v711
        %v786 = vmul.f32 %v577, %v713
        %v787 = vmul.f32 %v584, %v715
        %v788 = vadd.f32 %v780, 1.0
        %v789 = vadd.f32 %v781, 1.0
        %v790 = vadd.f32 %v782, 1.0
        %v791 = vadd.f32 %v783, 1.0
        %v792 = vadd.f32 %v784, 1.0
        %v793 = vadd.f32 %v785, 1.0
        %v794 = vadd.f32 %v786, 1.0
        %v795 = vadd.f32 %v787, 1.0
        %v796 = vrot.slane %v701, 7
        %v797 = vrot.slane %v703, 7
        %v798 = vrot.slane %v705, 7
        %v799 = vrot.slane %v707, 7
        %v800 = vrot.slane %v709, 7
        %v801 = vrot.slane %v711, 7
        %v802 = vrot.slane %v713, 7
        %v803 = vrot.slane %v715, 7
        %v812 = vmul.f32 %v748, %v796
        %v813 = vmul.f32 %v749, %v797
        %v814 = vmul.f32 %v750, %v798
        %v815 = vmul.f32 %v751, %v799
        %v816 = vmul.f32 %v752, %v800
        %v817 = vmul.f32 %v753, %v801
        %v818 = vmul.f32 %v754, %v802
        %v819 = vmul.f32 %v755, %v803
        %v820 = vadd.f32 %v812, 1.0
        %v821 = vadd.f32 %v813, 1.0
        %v822 = vadd.f32 %v814, 1.0
        %v823 = vadd.f32 %v815, 1.0
        %v824 = vadd.f32 %v816, 1.0
        %v825 = vadd.f32 %v817, 1.0
        %v826 = vadd.f32 %v818, 1.0
        %v827 = vadd.f32 %v819, 1.0
        %v836 = vrot.slane %v748, 5
        %v837 = vrot.slane %v749, 5
        %v838 = vrot.slane %v750, 5
        %v839 = vrot.slane %v751, 5
        %v840 = vrot.slane %v752, 5
        %v841 = vrot.slane %v753, 5
        %v842 = vrot.slane %v754, 5
        %v843 = vrot.slane %v755, 5
        %v852 = vsub.f32 %v385, %v836
        %v853 = vsub.f32 %v386, %v837
        %v854 = vsub.f32 %v387, %v838
        %v855 = vsub.f32 %v388, %v839
        %v856 = vsub.f32 %v389, %v840
        %v857 = vsub.f32 %v390, %v841
        %v858 = vsub.f32 %v391, %v842
        %v859 = vsub.f32 %v392, %v843
        %v860 = vmul.f32 %v852, %v724
        %v861 = vmul.f32 %v853, %v725
        %v862 = vmul.f32 %v854, %v726
        %v863 = vmul.f32 %v855, %v727
        %v864 = vmul.f32 %v856, %v728
        %v865 = vmul.f32 %v857, %v729
        %v866 = vmul.f32 %v858, %v730
        %v867 = vmul.f32 %v859, %v731
        %v868 = vadd.f32 %v860, 1.0
        %v869 = vadd.f32 %v861, 1.0
        %v870 = vadd.f32 %v862, 1.0
        %v871 = vadd.f32 %v863, 1.0
        %v872 = vadd.f32 %v864, 1.0
        %v873 = vadd.f32 %v865, 1.0
        %v874 = vadd.f32 %v866, 1.0
        %v875 = vadd.f32 %v867, 1.0
        %v876 = vmul.f32 %v385, %v724
        %v877 = vmul.f32 %v386, %v725
        %v878 = vmul.f32 %v387, %v726
        %v879 = vmul.f32 %v388, %v727
        %v880 = vmul.f32 %v389, %v728
        %v881 = vmul.f32 %v390, %v729
        %v882 = vmul.f32 %v391, %v730
        %v883 = vmul.f32 %v392, %v731
        %v884 = vadd.f32 %v876, 1.0
        %v885 = vadd.f32 %v877, 1.0
        %v886 = vadd.f32 %v878, 1.0
        %v887 = vadd.f32 %v879, 1.0
        %v888 = vadd.f32 %v880, 1.0
        %v889 = vadd.f32 %v881, 1.0
        %v890 = vadd.f32 %v882, 1.0
        %v891 = vadd.f32 %v883, 1.0
        %v900 = vrot.slane %v788, 1
        %v901 = vrot.slane %v789, 1
        %v902 = vrot.slane %v790, 1
        %v903 = vrot.slane %v791, 1
        %v904 = vrot.slane %v792, 1
        %v905 = vrot.slane %v793, 1
        %v906 = vrot.slane %v794, 1
        %v907 = vrot.slane %v795, 1
        %v924 = vrot.slane %v868, 2
        %v925 = vrot.slane %v869, 2
        %v926 = vrot.slane %v870, 2
        %v927 = vrot.slane %v871, 2
        %v928 = vrot.slane %v872, 2
        %v929 = vrot.slane %v873, 2
        %v930 = vrot.slane %v874, 2
        %v931 = vrot.slane %v875, 2
        %v948 = vrot.slane %v884, 1
        %v949 = vrot.slane %v885, 1
        %v950 = vrot.slane %v886, 1
        %v951 = vrot.slane %v887, 1
        %v952 = vrot.slane %v888, 1
        %v953 = vrot.slane %v889, 1
        %v954 = vrot.slane %v890, 1
        %v955 = vrot.slane %v891, 1
        %v964 = vsel %vm673, %v772, %v900
        %v965 = vsel %vm673, %v773, %v901
        %v966 = vsel %vm673, %v774, %v902
        %v967 = vsel %vm673, %v775, %v903
        %v968 = vsel %vm673, %v776, %v904
        %v969 = vsel %vm673, %v777, %v905
        %v970 = vsel %vm673, %v778, %v906
        %v971 = vsel %vm673, %v779, %v907
        %v972 = vsel %vm682, %v964, %v820
        %v973 = vsel %vm682, %v965, %v821
        %v974 = vsel %vm682, %v966, %v822
        %v975 = vsel %vm682, %v967, %v823
        %v976 = vsel %vm682, %v968, %v824
        %v977 = vsel %vm682, %v969, %v825
        %v978 = vsel %vm682, %v970, %v826
        %v979 = vsel %vm682, %v971, %v827
        %v980 = vsel %vm691, %v972, %v924
        %v981 = vsel %vm691, %v973, %v925
        %v982 = vsel %vm691, %v974, %v926
        %v983 = vsel %vm691, %v975, %v927
        %v984 = vsel %vm691, %v976, %v928
        %v985 = vsel %vm691, %v977, %v929
        %v986 = vsel %vm691, %v978, %v930
        %v987 = vsel %vm691, %v979, %v931
        %vm988 = vcmask 1043456
        %v989 = vsel %vm988, %v980, %v948
        %v990 = vsel %vm988, %v981, %v949
        %v991 = vsel %vm988, %v982, %v950
        %v992 = vsel %vm988, %v983, %v951
        %v993 = vsel %vm988, %v984, %v952
        %v994 = vsel %vm988, %v985, %v953
        %v995 = vsel %vm988, %v986, %v954
        %v996 = vsel %vm988, %v987, %v955
        %v997 = vlog2.pop %v989
        %v998 = vmul.f32 %v997, 0.6931472
        %v999 = vlog2.pop %v990
        %v1000 = vmul.f32 %v999, 0.6931472
        %v1001 = vlog2.pop %v991
        %v1002 = vmul.f32 %v1001, 0.6931472
        %v1003 = vlog2.pop %v992
        %v1004 = vmul.f32 %v1003, 0.6931472
        %v1005 = vlog2.pop %v993
        %v1006 = vmul.f32 %v1005, 0.6931472
        %v1007 = vlog2.pop %v994
        %v1008 = vmul.f32 %v1007, 0.6931472
        %v1009 = vlog2.pop %v995
        %v1010 = vmul.f32 %v1009, 0.6931472
        %v1011 = vlog2.pop %v996
        %v1012 = vmul.f32 %v1011, 0.6931472
        %v1021 = vrot.slane %v998, 7
        %v1022 = vrot.slane %v1000, 7
        %v1023 = vrot.slane %v1002, 7
        %v1024 = vrot.slane %v1004, 7
        %v1025 = vrot.slane %v1006, 7
        %v1026 = vrot.slane %v1008, 7
        %v1027 = vrot.slane %v1010, 7
        %v1028 = vrot.slane %v1012, 7
        %v1037 = vsel %vm673, %v417, %v1021
        %v1038 = vsel %vm673, %v418, %v1022
        %v1039 = vsel %vm673, %v419, %v1023
        %v1040 = vsel %vm673, %v420, %v1024
        %v1041 = vsel %vm673, %v421, %v1025
        %v1042 = vsel %vm673, %v422, %v1026
        %v1043 = vsel %vm673, %v423, %v1027
        %v1044 = vsel %vm673, %v424, %v1028
        %vm1045 = vcmask 1045504
        %v1046 = vsel %vm1045, %v1037, 0.0
        %v1047 = vsel %vm1045, %v1038, 0.0
        %v1048 = vsel %vm1045, %v1039, 0.0
        %v1049 = vsel %vm1045, %v1040, 0.0
        %v1050 = vsel %vm1045, %v1041, 0.0
        %v1051 = vsel %vm1045, %v1042, 0.0
        %v1052 = vsel %vm1045, %v1043, 0.0
        %v1053 = vsel %vm1045, %v1044, 0.0
        %v1054 = vld [vmem:[%s1] sm:$0xff]
        %v1055 = vld [vmem:[%s1 + $0x8] sm:$0xff]
        %v1056 = vld [vmem:[%s1 + $0x10] sm:$0xff]
        %v1057 = vld [vmem:[%s1 + $0x18] sm:$0xff]
        %v1058 = vld [vmem:[%s2] sm:$0xff]
        %v1059 = vld [vmem:[%s2 + $0x8] sm:$0xff]
        %v1060 = vld [vmem:[%s2 + $0x10] sm:$0xff]
        %v1061 = vld [vmem:[%s2 + $0x18] sm:$0xff]
        %1063 = vset.pattern.permute.xlu0 0
        %1064 = vperm.xlu0 %1063, %v1058
        %v1065 = vpop.permute.xlu0 %1064
        %1068 = vset.pattern.permute.xlu0 0
        %1069 = vperm.xlu0 %1068, %v1059
        %v1070 = vpop.permute.xlu0 %1069
        %1073 = vset.pattern.permute.xlu0 0
        %1074 = vperm.xlu0 %1073, %v1060
        %v1075 = vpop.permute.xlu0 %1074
        %1078 = vset.pattern.permute.xlu0 0
        %1079 = vperm.xlu0 %1078, %v1061
        %v1080 = vpop.permute.xlu0 %1079
        %vm1082 = vcmask 64512
        %v1084 = vsel %vm1082, %v1054, 0
        %v1087 = vsel %vm1082, %v1055, 0
        %v1090 = vsel %vm1082, %v1056, 0
        %v1093 = vsel %vm1082, %v1057, 0
        %1095 = vmatprep.subr.mxu0 %v1047
        %1096 = vmatpush1.msra.mxu0 %v1046
        %1097 = vmatprep.subr.mxu0 0.0
        %1098 = vmatpush1.msra.mxu0 0.0
        %1099 = vmatprep.subr.mxu0 0.0
        %1100 = vmatpush1.msra.mxu0 0.0
        %1101 = vmatprep.subr.mxu0 0.0
        %1102 = vmatpush1.msra.mxu0 0.0
        %1103 = vmatprep.subr.mxu0 0.0
        %1104 = vmatpush1.msra.mxu0 0.0
        %1105 = vmatprep.subr.mxu0 0.0
        %1106 = vmatpush1.msra.mxu0 0.0
        %1107 = vmatprep.subr.mxu0 0.0
        %1108 = vmatpush1.msra.mxu0 0.0
        %1109 = vmatprep.subr.mxu0 0.0
        %1110 = vmatpush1.msra.mxu0 0.0
        %1111 = vmatprep.subr.mxu0 0.0
        %1112 = vmatpush1.msra.mxu0 0.0
        %1113 = vmatprep.subr.mxu0 0.0
        %1114 = vmatpush1.msra.mxu0 0.0
        %1115 = vmatprep.subr.mxu0 0.0
        %1116 = vmatpush1.msra.mxu0 0.0
        %1117 = vmatprep.subr.mxu0 0.0
        %1118 = vmatpush1.msra.mxu0 0.0
        %1119 = vmatprep.subr.mxu0 0.0
        %1120 = vmatpush1.msra.mxu0 0.0
        %1121 = vmatprep.subr.mxu0 0.0
        %1122 = vmatpush1.msra.mxu0 0.0
        %1123 = vmatprep.subr.mxu0 0.0
        %1124 = vmatpush1.msra.mxu0 0.0
        %1125 = vmatprep.subr.mxu0 0.0
        %1126 = vmatpush1.msra.mxu0 0.0
        %1127 = vmatprep.subr.mxu0 0.0
        %1128 = vmatpush1.msra.mxu0 0.0
        %1129 = vmatprep.subr.mxu0 0.0
        %1130 = vmatpush1.msra.mxu0 0.0
        %1131 = vmatprep.subr.mxu0 0.0
        %1132 = vmatpush1.msra.mxu0 0.0
        %1133 = vmatprep.subr.mxu0 0.0
        %1134 = vmatpush1.msra.mxu0 0.0
        %1135 = vmatprep.subr.mxu0 0.0
        %1136 = vmatpush1.msra.mxu0 0.0
        %1137 = vmatprep.subr.mxu0 0.0
        %1138 = vmatpush1.msra.mxu0 0.0
        %1139 = vmatprep.subr.mxu0 0.0
        %1140 = vmatpush1.msra.mxu0 0.0
        %1141 = vmatprep.subr.mxu0 0.0
        %1142 = vmatpush1.msra.mxu0 0.0
        %1143 = vmatprep.subr.mxu0 0.0
        %1144 = vmatpush1.msra.mxu0 0.0
        %1145 = vmatprep.subr.mxu0 0.0
        %1146 = vmatpush1.msra.mxu0 0.0
        %1147 = vmatprep.subr.mxu0 0.0
        %1148 = vmatpush1.msra.mxu0 0.0
        %1149 = vmatprep.subr.mxu0 0.0
        %1150 = vmatpush1.msra.mxu0 0.0
        %1151 = vmatprep.subr.mxu0 0.0
        %1152 = vmatpush1.msra.mxu0 0.0
        %1153 = vmatprep.subr.mxu0 0.0
        %1154 = vmatpush1.msra.mxu0 0.0
        %1155 = vmatprep.subr.mxu0 0.0
        %1156 = vmatpush1.msra.mxu0 0.0
        %1157 = vmatprep.subr.mxu0 0.0
        %1158 = vmatpush1.msra.mxu0 0.0
        %1159 = vmatprep.mubr.f32.mxu0 0.0
        %1160 = vmatmul.mubr.f32.gmra.mrb[0].mxu0 %v1084
        %v1161 = vpop.f32.mrb[0].mxu0
        %v1162 = vadd.f32 %v1065, %v1161
        %v1163 = vpop.f32.mrb[0].mxu0
        %v1164 = vadd.f32 %v1065, %v1163
        %1165 = vmatprep.mubr.f32.mxu0 0.0
        %1166 = vmatmul.mubr.f32.gmra.mrb[0].mxu0 %v1087
        %v1167 = vpop.f32.mrb[0].mxu0
        %v1168 = vadd.f32 %v1070, %v1167
        %v1169 = vpop.f32.mrb[0].mxu0
        %v1170 = vadd.f32 %v1070, %v1169
        %1171 = vmatprep.mubr.f32.mxu0 0.0
        %1172 = vmatmul.mubr.f32.gmra.mrb[0].mxu0 %v1090
        %v1173 = vpop.f32.mrb[0].mxu0
        %v1174 = vadd.f32 %v1075, %v1173
        %v1175 = vpop.f32.mrb[0].mxu0
        %v1176 = vadd.f32 %v1075, %v1175
        %1177 = vmatprep.mubr.f32.mxu0 0.0
        %1178 = vmatmul.mubr.f32.gmra.mrb[0].mxu0 %v1093
        %v1179 = vpop.f32.mrb[0].mxu0
        %v1180 = vadd.f32 %v1080, %v1179
        %v1181 = vpop.f32.mrb[0].mxu0
        %v1182 = vadd.f32 %v1080, %v1181
        %1183 = vdwg.mxu0
        %1184 = vmatprep.subr.mxu0 %v1049
        %1185 = vmatpush1.msra.mxu0 %v1048
        %1186 = vmatprep.subr.mxu0 0.0
        %1187 = vmatpush1.msra.mxu0 0.0
        %1188 = vmatprep.subr.mxu0 0.0
        %1189 = vmatpush1.msra.mxu0 0.0
        %1190 = vmatprep.subr.mxu0 0.0
        %1191 = vmatpush1.msra.mxu0 0.0
        %1192 = vmatprep.subr.mxu0 0.0
        %1193 = vmatpush1.msra.mxu0 0.0
        %1194 = vmatprep.subr.mxu0 0.0
        %1195 = vmatpush1.msra.mxu0 0.0
        %1196 = vmatprep.subr.mxu0 0.0
        %1197 = vmatpush1.msra.mxu0 0.0
        %1198 = vmatprep.subr.mxu0 0.0
        %1199 = vmatpush1.msra.mxu0 0.0
        %1200 = vmatprep.subr.mxu0 0.0
        %1201 = vmatpush1.msra.mxu0 0.0
        %1202 = vmatprep.subr.mxu0 0.0
        %1203 = vmatpush1.msra.mxu0 0.0
        %1204 = vmatprep.subr.mxu0 0.0
        %1205 = vmatpush1.msra.mxu0 0.0
        %1206 = vmatprep.subr.mxu0 0.0
        %1207 = vmatpush1.msra.mxu0 0.0
        %1208 = vmatprep.subr.mxu0 0.0
        %1209 = vmatpush1.msra.mxu0 0.0
        %1210 = vmatprep.subr.mxu0 0.0
        %1211 = vmatpush1.msra.mxu0 0.0
        %1212 = vmatprep.subr.mxu0 0.0
        %1213 = vmatpush1.msra.mxu0 0.0
        %1214 = vmatprep.subr.mxu0 0.0
        %1215 = vmatpush1.msra.mxu0 0.0
        %1216 = vmatprep.subr.mxu0 0.0
        %1217 = vmatpush1.msra.mxu0 0.0
        %1218 = vmatprep.subr.mxu0 0.0
        %1219 = vmatpush1.msra.mxu0 0.0
        %1220 = vmatprep.subr.mxu0 0.0
        %1221 = vmatpush1.msra.mxu0 0.0
        %1222 = vmatprep.subr.mxu0 0.0
        %1223 = vmatpush1.msra.mxu0 0.0
        %1224 = vmatprep.subr.mxu0 0.0
        %1225 = vmatpush1.msra.mxu0 0.0
        %1226 = vmatprep.subr.mxu0 0.0
        %1227 = vmatpush1.msra.mxu0 0.0
        %1228 = vmatprep.subr.mxu0 0.0
        %1229 = vmatpush1.msra.mxu0 0.0
        %1230 = vmatprep.subr.mxu0 0.0
        %1231 = vmatpush1.msra.mxu0 0.0
        %1232 = vmatprep.subr.mxu0 0.0
        %1233 = vmatpush1.msra.mxu0 0.0
        %1234 = vmatprep.subr.mxu0 0.0
        %1235 = vmatpush1.msra.mxu0 0.0
        %1236 = vmatprep.subr.mxu0 0.0
        %1237 = vmatpush1.msra.mxu0 0.0
        %1238 = vmatprep.subr.mxu0 0.0
        %1239 = vmatpush1.msra.mxu0 0.0
        %1240 = vmatprep.subr.mxu0 0.0
        %1241 = vmatpush1.msra.mxu0 0.0
        %1242 = vmatprep.subr.mxu0 0.0
        %1243 = vmatpush1.msra.mxu0 0.0
        %1244 = vmatprep.subr.mxu0 0.0
        %1245 = vmatpush1.msra.mxu0 0.0
        %1246 = vmatprep.subr.mxu0 0.0
        %1247 = vmatpush1.msra.mxu0 0.0
        %1248 = vmatprep.mubr.f32.mxu0 0.0
        %1249 = vmatmul.mubr.f32.gmra.mrb[0].mxu0 %v1084
        %v1250 = vpop.f32.mrb[0].mxu0
        %v1251 = vadd.f32 %v1065, %v1250
        %v1252 = vpop.f32.mrb[0].mxu0
        %v1253 = vadd.f32 %v1065, %v1252
        %1254 = vmatprep.mubr.f32.mxu0 0.0
        %1255 = vmatmul.mubr.f32.gmra.mrb[0].mxu0 %v1087
        %v1256 = vpop.f32.mrb[0].mxu0
        %v1257 = vadd.f32 %v1070, %v1256
        %v1258 = vpop.f32.mrb[0].mxu0
        %v1259 = vadd.f32 %v1070, %v1258
        %1260 = vmatprep.mubr.f32.mxu0 0.0
        %1261 = vmatmul.mubr.f32.gmra.mrb[0].mxu0 %v1090
        %v1262 = vpop.f32.mrb[0].mxu0
        %v1263 = vadd.f32 %v1075, %v1262
        %v1264 = vpop.f32.mrb[0].mxu0
        %v1265 = vadd.f32 %v1075, %v1264
        %1266 = vmatprep.mubr.f32.mxu0 0.0
        %1267 = vmatmul.mubr.f32.gmra.mrb[0].mxu0 %v1093
        %v1268 = vpop.f32.mrb[0].mxu0
        %v1269 = vadd.f32 %v1080, %v1268
        %v1270 = vpop.f32.mrb[0].mxu0
        %v1271 = vadd.f32 %v1080, %v1270
        %1272 = vdwg.mxu0
        %1273 = vmatprep.subr.mxu0 %v1051
        %1274 = vmatpush1.msra.mxu0 %v1050
        %1275 = vmatprep.subr.mxu0 0.0
        %1276 = vmatpush1.msra.mxu0 0.0
        %1277 = vmatprep.subr.mxu0 0.0
        %1278 = vmatpush1.msra.mxu0 0.0
        %1279 = vmatprep.subr.mxu0 0.0
        %1280 = vmatpush1.msra.mxu0 0.0
        %1281 = vmatprep.subr.mxu0 0.0
        %1282 = vmatpush1.msra.mxu0 0.0
        %1283 = vmatprep.subr.mxu0 0.0
        %1284 = vmatpush1.msra.mxu0 0.0
        %1285 = vmatprep.subr.mxu0 0.0
        %1286 = vmatpush1.msra.mxu0 0.0
        %1287 = vmatprep.subr.mxu0 0.0
        %1288 = vmatpush1.msra.mxu0 0.0
        %1289 = vmatprep.subr.mxu0 0.0
        %1290 = vmatpush1.msra.mxu0 0.0
        %1291 = vmatprep.subr.mxu0 0.0
        %1292 = vmatpush1.msra.mxu0 0.0
        %1293 = vmatprep.subr.mxu0 0.0
        %1294 = vmatpush1.msra.mxu0 0.0
        %1295 = vmatprep.subr.mxu0 0.0
        %1296 = vmatpush1.msra.mxu0 0.0
        %1297 = vmatprep.subr.mxu0 0.0
        %1298 = vmatpush1.msra.mxu0 0.0
        %1299 = vmatprep.subr.mxu0 0.0
        %1300 = vmatpush1.msra.mxu0 0.0
        %1301 = vmatprep.subr.mxu0 0.0
        %1302 = vmatpush1.msra.mxu0 0.0
        %1303 = vmatprep.subr.mxu0 0.0
        %1304 = vmatpush1.msra.mxu0 0.0
        %1305 = vmatprep.subr.mxu0 0.0
        %1306 = vmatpush1.msra.mxu0 0.0
        %1307 = vmatprep.subr.mxu0 0.0
        %1308 = vmatpush1.msra.mxu0 0.0
        %1309 = vmatprep.subr.mxu0 0.0
        %1310 = vmatpush1.msra.mxu0 0.0
        %1311 = vmatprep.subr.mxu0 0.0
        %1312 = vmatpush1.msra.mxu0 0.0
        %1313 = vmatprep.subr.mxu0 0.0
        %1314 = vmatpush1.msra.mxu0 0.0
        %1315 = vmatprep.subr.mxu0 0.0
        %1316 = vmatpush1.msra.mxu0 0.0
        %1317 = vmatprep.subr.mxu0 0.0
        %1318 = vmatpush1.msra.mxu0 0.0
        %1319 = vmatprep.subr.mxu0 0.0
        %1320 = vmatpush1.msra.mxu0 0.0
        %1321 = vmatprep.subr.mxu0 0.0
        %1322 = vmatpush1.msra.mxu0 0.0
        %1323 = vmatprep.subr.mxu0 0.0
        %1324 = vmatpush1.msra.mxu0 0.0
        %1325 = vmatprep.subr.mxu0 0.0
        %1326 = vmatpush1.msra.mxu0 0.0
        %1327 = vmatprep.subr.mxu0 0.0
        %1328 = vmatpush1.msra.mxu0 0.0
        %1329 = vmatprep.subr.mxu0 0.0
        %1330 = vmatpush1.msra.mxu0 0.0
        %1331 = vmatprep.subr.mxu0 0.0
        %1332 = vmatpush1.msra.mxu0 0.0
        %1333 = vmatprep.subr.mxu0 0.0
        %1334 = vmatpush1.msra.mxu0 0.0
        %1335 = vmatprep.subr.mxu0 0.0
        %1336 = vmatpush1.msra.mxu0 0.0
        %1337 = vmatprep.mubr.f32.mxu0 0.0
        %1338 = vmatmul.mubr.f32.gmra.mrb[0].mxu0 %v1084
        %v1339 = vpop.f32.mrb[0].mxu0
        %v1340 = vadd.f32 %v1065, %v1339
        %v1341 = vpop.f32.mrb[0].mxu0
        %v1342 = vadd.f32 %v1065, %v1341
        %1343 = vmatprep.mubr.f32.mxu0 0.0
        %1344 = vmatmul.mubr.f32.gmra.mrb[0].mxu0 %v1087
        %v1345 = vpop.f32.mrb[0].mxu0
        %v1346 = vadd.f32 %v1070, %v1345
        %v1347 = vpop.f32.mrb[0].mxu0
        %v1348 = vadd.f32 %v1070, %v1347
        %1349 = vmatprep.mubr.f32.mxu0 0.0
        %1350 = vmatmul.mubr.f32.gmra.mrb[0].mxu0 %v1090
        %v1351 = vpop.f32.mrb[0].mxu0
        %v1352 = vadd.f32 %v1075, %v1351
        %v1353 = vpop.f32.mrb[0].mxu0
        %v1354 = vadd.f32 %v1075, %v1353
        %1355 = vmatprep.mubr.f32.mxu0 0.0
        %1356 = vmatmul.mubr.f32.gmra.mrb[0].mxu0 %v1093
        %v1357 = vpop.f32.mrb[0].mxu0
        %v1358 = vadd.f32 %v1080, %v1357
        %v1359 = vpop.f32.mrb[0].mxu0
        %v1360 = vadd.f32 %v1080, %v1359
        %1361 = vdwg.mxu0
        %1362 = vmatprep.subr.mxu0 %v1053
        %1363 = vmatpush1.msra.mxu0 %v1052
        %1364 = vmatprep.subr.mxu0 0.0
        %1365 = vmatpush1.msra.mxu0 0.0
        %1366 = vmatprep.subr.mxu0 0.0
        %1367 = vmatpush1.msra.mxu0 0.0
        %1368 = vmatprep.subr.mxu0 0.0
        %1369 = vmatpush1.msra.mxu0 0.0
        %1370 = vmatprep.subr.mxu0 0.0
        %1371 = vmatpush1.msra.mxu0 0.0
        %1372 = vmatprep.subr.mxu0 0.0
        %1373 = vmatpush1.msra.mxu0 0.0
        %1374 = vmatprep.subr.mxu0 0.0
        %1375 = vmatpush1.msra.mxu0 0.0
        %1376 = vmatprep.subr.mxu0 0.0
        %1377 = vmatpush1.msra.mxu0 0.0
        %1378 = vmatprep.subr.mxu0 0.0
        %1379 = vmatpush1.msra.mxu0 0.0
        %1380 = vmatprep.subr.mxu0 0.0
        %1381 = vmatpush1.msra.mxu0 0.0
        %1382 = vmatprep.subr.mxu0 0.0
        %1383 = vmatpush1.msra.mxu0 0.0
        %1384 = vmatprep.subr.mxu0 0.0
        %1385 = vmatpush1.msra.mxu0 0.0
        %1386 = vmatprep.subr.mxu0 0.0
        %1387 = vmatpush1.msra.mxu0 0.0
        %1388 = vmatprep.subr.mxu0 0.0
        %1389 = vmatpush1.msra.mxu0 0.0
        %1390 = vmatprep.subr.mxu0 0.0
        %1391 = vmatpush1.msra.mxu0 0.0
        %1392 = vmatprep.subr.mxu0 0.0
        %1393 = vmatpush1.msra.mxu0 0.0
        %1394 = vmatprep.subr.mxu0 0.0
        %1395 = vmatpush1.msra.mxu0 0.0
        %1396 = vmatprep.subr.mxu0 0.0
        %1397 = vmatpush1.msra.mxu0 0.0
        %1398 = vmatprep.subr.mxu0 0.0
        %1399 = vmatpush1.msra.mxu0 0.0
        %1400 = vmatprep.subr.mxu0 0.0
        %1401 = vmatpush1.msra.mxu0 0.0
        %1402 = vmatprep.subr.mxu0 0.0
        %1403 = vmatpush1.msra.mxu0 0.0
        %1404 = vmatprep.subr.mxu0 0.0
        %1405 = vmatpush1.msra.mxu0 0.0
        %1406 = vmatprep.subr.mxu0 0.0
        %1407 = vmatpush1.msra.mxu0 0.0
        %1408 = vmatprep.subr.mxu0 0.0
        %1409 = vmatpush1.msra.mxu0 0.0
        %1410 = vmatprep.subr.mxu0 0.0
        %1411 = vmatpush1.msra.mxu0 0.0
        %1412 = vmatprep.subr.mxu0 0.0
        %1413 = vmatpush1.msra.mxu0 0.0
        %1414 = vmatprep.subr.mxu0 0.0
        %1415 = vmatpush1.msra.mxu0 0.0
        %1416 = vmatprep.subr.mxu0 0.0
        %1417 = vmatpush1.msra.mxu0 0.0
        %1418 = vmatprep.subr.mxu0 0.0
        %1419 = vmatpush1.msra.mxu0 0.0
        %1420 = vmatprep.subr.mxu0 0.0
        %1421 = vmatpush1.msra.mxu0 0.0
        %1422 = vmatprep.subr.mxu0 0.0
        %1423 = vmatpush1.msra.mxu0 0.0
        %1424 = vmatprep.subr.mxu0 0.0
        %1425 = vmatpush1.msra.mxu0 0.0
        %1426 = vmatprep.mubr.f32.mxu0 0.0
        %1427 = vmatmul.mubr.f32.gmra.mrb[0].mxu0 %v1084
        %v1428 = vpop.f32.mrb[0].mxu0
        %v1429 = vadd.f32 %v1065, %v1428
        %v1430 = vpop.f32.mrb[0].mxu0
        %v1431 = vadd.f32 %v1065, %v1430
        %1432 = vmatprep.mubr.f32.mxu0 0.0
        %1433 = vmatmul.mubr.f32.gmra.mrb[0].mxu0 %v1087
        %v1434 = vpop.f32.mrb[0].mxu0
        %v1435 = vadd.f32 %v1070, %v1434
        %v1436 = vpop.f32.mrb[0].mxu0
        %v1437 = vadd.f32 %v1070, %v1436
        %1438 = vmatprep.mubr.f32.mxu0 0.0
        %1439 = vmatmul.mubr.f32.gmra.mrb[0].mxu0 %v1090
        %v1440 = vpop.f32.mrb[0].mxu0
        %v1441 = vadd.f32 %v1075, %v1440
        %v1442 = vpop.f32.mrb[0].mxu0
        %v1443 = vadd.f32 %v1075, %v1442
        %1444 = vmatprep.mubr.f32.mxu0 0.0
        %1445 = vmatmul.mubr.f32.gmra.mrb[0].mxu0 %v1093
        %v1446 = vpop.f32.mrb[0].mxu0
        %v1447 = vadd.f32 %v1080, %v1446
        %v1448 = vpop.f32.mrb[0].mxu0
        %v1449 = vadd.f32 %v1080, %v1448
        %1450 = vdwg.mxu0
        %v1451 = vmul.f32 %v1162, 0.5
        %v1452 = vmul.f32 %v1164, 0.5
        %v1453 = vmul.f32 %v1251, 0.5
        %v1454 = vmul.f32 %v1253, 0.5
        %v1455 = vmul.f32 %v1340, 0.5
        %v1456 = vmul.f32 %v1342, 0.5
        %v1457 = vmul.f32 %v1429, 0.5
        %v1458 = vmul.f32 %v1431, 0.5
        %v1459 = vmul.f32 %v1168, 0.5
        %v1460 = vmul.f32 %v1170, 0.5
        %v1461 = vmul.f32 %v1257, 0.5
        %v1462 = vmul.f32 %v1259, 0.5
        %v1463 = vmul.f32 %v1346, 0.5
        %v1464 = vmul.f32 %v1348, 0.5
        %v1465 = vmul.f32 %v1435, 0.5
        %v1466 = vmul.f32 %v1437, 0.5
        %v1467 = vmul.f32 %v1174, 0.5
        %v1468 = vmul.f32 %v1176, 0.5
        %v1469 = vmul.f32 %v1263, 0.5
        %v1470 = vmul.f32 %v1265, 0.5
        %v1471 = vmul.f32 %v1352, 0.5
        %v1472 = vmul.f32 %v1354, 0.5
        %v1473 = vmul.f32 %v1441, 0.5
        %v1474 = vmul.f32 %v1443, 0.5
        %v1475 = vmul.f32 %v1180, 0.5
        %v1476 = vmul.f32 %v1182, 0.5
        %v1477 = vmul.f32 %v1269, 0.5
        %v1478 = vmul.f32 %v1271, 0.5
        %v1479 = vmul.f32 %v1358, 0.5
        %v1480 = vmul.f32 %v1360, 0.5
        %v1481 = vmul.f32 %v1447, 0.5
        %v1482 = vmul.f32 %v1449, 0.5
        %v1483 = vtanh.pop %v1451
        %v1484 = vtanh.pop %v1452
        %v1485 = vtanh.pop %v1453
        %v1486 = vtanh.pop %v1454
        %v1487 = vtanh.pop %v1455
        %v1488 = vtanh.pop %v1456
        %v1489 = vtanh.pop %v1457
        %v1490 = vtanh.pop %v1458
        %v1491 = vtanh.pop %v1459
        %v1492 = vtanh.pop %v1460
        %v1493 = vtanh.pop %v1461
        %v1494 = vtanh.pop %v1462
        %v1495 = vtanh.pop %v1463
        %v1496 = vtanh.pop %v1464
        %v1497 = vtanh.pop %v1465
        %v1498 = vtanh.pop %v1466
        %v1499 = vtanh.pop %v1467
        %v1500 = vtanh.pop %v1468
        %v1501 = vtanh.pop %v1469
        %v1502 = vtanh.pop %v1470
        %v1503 = vtanh.pop %v1471
        %v1504 = vtanh.pop %v1472
        %v1505 = vtanh.pop %v1473
        %v1506 = vtanh.pop %v1474
        %v1507 = vtanh.pop %v1475
        %v1508 = vtanh.pop %v1476
        %v1509 = vtanh.pop %v1477
        %v1510 = vtanh.pop %v1478
        %v1511 = vtanh.pop %v1479
        %v1512 = vtanh.pop %v1480
        %v1513 = vtanh.pop %v1481
        %v1514 = vtanh.pop %v1482
        %v1515 = vmul.f32 %v1483, 0.5
        %v1516 = vmul.f32 %v1484, 0.5
        %v1517 = vmul.f32 %v1485, 0.5
        %v1518 = vmul.f32 %v1486, 0.5
        %v1519 = vmul.f32 %v1487, 0.5
        %v1520 = vmul.f32 %v1488, 0.5
        %v1521 = vmul.f32 %v1489, 0.5
        %v1522 = vmul.f32 %v1490, 0.5
        %v1523 = vmul.f32 %v1491, 0.5
        %v1524 = vmul.f32 %v1492, 0.5
        %v1525 = vmul.f32 %v1493, 0.5
        %v1526 = vmul.f32 %v1494, 0.5
        %v1527 = vmul.f32 %v1495, 0.5
        %v1528 = vmul.f32 %v1496, 0.5
        %v1529 = vmul.f32 %v1497, 0.5
        %v1530 = vmul.f32 %v1498, 0.5
        %v1531 = vmul.f32 %v1499, 0.5
        %v1532 = vmul.f32 %v1500, 0.5
        %v1533 = vmul.f32 %v1501, 0.5
        %v1534 = vmul.f32 %v1502, 0.5
        %v1535 = vmul.f32 %v1503, 0.5
        %v1536 = vmul.f32 %v1504, 0.5
        %v1537 = vmul.f32 %v1505, 0.5
        %v1538 = vmul.f32 %v1506, 0.5
        %v1539 = vmul.f32 %v1507, 0.5
        %v1540 = vmul.f32 %v1508, 0.5
        %v1541 = vmul.f32 %v1509, 0.5
        %v1542 = vmul.f32 %v1510, 0.5
        %v1543 = vmul.f32 %v1511, 0.5
        %v1544 = vmul.f32 %v1512, 0.5
        %v1545 = vmul.f32 %v1513, 0.5
        %v1546 = vmul.f32 %v1514, 0.5
        %v1547 = vadd.f32 %v1515, 0.5
        %v1548 = vadd.f32 %v1516, 0.5
        %v1549 = vadd.f32 %v1517, 0.5
        %v1550 = vadd.f32 %v1518, 0.5
        %v1551 = vadd.f32 %v1519, 0.5
        %v1552 = vadd.f32 %v1520, 0.5
        %v1553 = vadd.f32 %v1521, 0.5
        %v1554 = vadd.f32 %v1522, 0.5
        %v1555 = vadd.f32 %v1523, 0.5
        %v1556 = vadd.f32 %v1524, 0.5
        %v1557 = vadd.f32 %v1525, 0.5
        %v1558 = vadd.f32 %v1526, 0.5
        %v1559 = vadd.f32 %v1527, 0.5
        %v1560 = vadd.f32 %v1528, 0.5
        %v1561 = vadd.f32 %v1529, 0.5
        %v1562 = vadd.f32 %v1530, 0.5
        %v1563 = vadd.f32 %v1531, 0.5
        %v1564 = vadd.f32 %v1532, 0.5
        %v1565 = vadd.f32 %v1533, 0.5
        %v1566 = vadd.f32 %v1534, 0.5
        %v1567 = vadd.f32 %v1535, 0.5
        %v1568 = vadd.f32 %v1536, 0.5
        %v1569 = vadd.f32 %v1537, 0.5
        %v1570 = vadd.f32 %v1538, 0.5
        %v1571 = vadd.f32 %v1539, 0.5
        %v1572 = vadd.f32 %v1540, 0.5
        %v1573 = vadd.f32 %v1541, 0.5
        %v1574 = vadd.f32 %v1542, 0.5
        %v1575 = vadd.f32 %v1543, 0.5
        %v1576 = vadd.f32 %v1544, 0.5
        %v1577 = vadd.f32 %v1545, 0.5
        %v1578 = vadd.f32 %v1546, 0.5
        %v1579 = vld [vmem:[%s3] sm:$0xff]
        %v1580 = vld [vmem:[%s3 + $0x8] sm:$0xff]
        %v1581 = vld [vmem:[%s3 + $0x10] sm:$0xff]
        %v1582 = vld [vmem:[%s3 + $0x18] sm:$0xff]
        %v1583 = vld [vmem:[%s4] sm:$0xff]
        %v1584 = vld [vmem:[%s4 + $0x8] sm:$0xff]
        %v1585 = vld [vmem:[%s4 + $0x10] sm:$0xff]
        %v1586 = vld [vmem:[%s4 + $0x18] sm:$0xff]
        %1588 = vset.pattern.permute.xlu0 0
        %1589 = vperm.xlu0 %1588, %v1583
        %v1590 = vpop.permute.xlu0 %1589
        %1593 = vset.pattern.permute.xlu0 0
        %1594 = vperm.xlu0 %1593, %v1584
        %v1595 = vpop.permute.xlu0 %1594
        %1598 = vset.pattern.permute.xlu0 0
        %1599 = vperm.xlu0 %1598, %v1585
        %v1600 = vpop.permute.xlu0 %1599
        %1603 = vset.pattern.permute.xlu0 0
        %1604 = vperm.xlu0 %1603, %v1586
        %v1605 = vpop.permute.xlu0 %1604
        %vm1607 = vcmask 261120
        %v1609 = vsel %vm1607, %v1579, 0
        %v1612 = vsel %vm1607, %v1580, 0
        %v1615 = vsel %vm1607, %v1581, 0
        %v1618 = vsel %vm1607, %v1582, 0
        %1620 = vmatprep.subr.mxu0 %v1548
        %1621 = vmatpush1.msra.mxu0 %v1547
        %1622 = vmatprep.subr.mxu0 %v1556
        %1623 = vmatpush1.msra.mxu0 %v1555
        %1624 = vmatprep.subr.mxu0 %v1564
        %1625 = vmatpush1.msra.mxu0 %v1563
        %1626 = vmatprep.subr.mxu0 %v1572
        %1627 = vmatpush1.msra.mxu0 %v1571
        %1628 = vmatprep.subr.mxu0 0.0
        %1629 = vmatpush1.msra.mxu0 0.0
        %1630 = vmatprep.subr.mxu0 0.0
        %1631 = vmatpush1.msra.mxu0 0.0
        %1632 = vmatprep.subr.mxu0 0.0
        %1633 = vmatpush1.msra.mxu0 0.0
        %1634 = vmatprep.subr.mxu0 0.0
        %1635 = vmatpush1.msra.mxu0 0.0
        %1636 = vmatprep.subr.mxu0 0.0
        %1637 = vmatpush1.msra.mxu0 0.0
        %1638 = vmatprep.subr.mxu0 0.0
        %1639 = vmatpush1.msra.mxu0 0.0
        %1640 = vmatprep.subr.mxu0 0.0
        %1641 = vmatpush1.msra.mxu0 0.0
        %1642 = vmatprep.subr.mxu0 0.0
        %1643 = vmatpush1.msra.mxu0 0.0
        %1644 = vmatprep.subr.mxu0 0.0
        %1645 = vmatpush1.msra.mxu0 0.0
        %1646 = vmatprep.subr.mxu0 0.0
        %1647 = vmatpush1.msra.mxu0 0.0
        %1648 = vmatprep.subr.mxu0 0.0
        %1649 = vmatpush1.msra.mxu0 0.0
        %1650 = vmatprep.subr.mxu0 0.0
        %1651 = vmatpush1.msra.mxu0 0.0
        %1652 = vmatprep.subr.mxu0 0.0
        %1653 = vmatpush1.msra.mxu0 0.0
        %1654 = vmatprep.subr.mxu0 0.0
        %1655 = vmatpush1.msra.mxu0 0.0
        %1656 = vmatprep.subr.mxu0 0.0
        %1657 = vmatpush1.msra.mxu0 0.0
        %1658 = vmatprep.subr.mxu0 0.0
        %1659 = vmatpush1.msra.mxu0 0.0
        %1660 = vmatprep.subr.mxu0 0.0
        %1661 = vmatpush1.msra.mxu0 0.0
        %1662 = vmatprep.subr.mxu0 0.0
        %1663 = vmatpush1.msra.mxu0 0.0
        %1664 = vmatprep.subr.mxu0 0.0
        %1665 = vmatpush1.msra.mxu0 0.0
        %1666 = vmatprep.subr.mxu0 0.0
        %1667 = vmatpush1.msra.mxu0 0.0
        %1668 = vmatprep.subr.mxu0 0.0
        %1669 = vmatpush1.msra.mxu0 0.0
        %1670 = vmatprep.subr.mxu0 0.0
        %1671 = vmatpush1.msra.mxu0 0.0
        %1672 = vmatprep.subr.mxu0 0.0
        %1673 = vmatpush1.msra.mxu0 0.0
        %1674 = vmatprep.subr.mxu0 0.0
        %1675 = vmatpush1.msra.mxu0 0.0
        %1676 = vmatprep.subr.mxu0 0.0
        %1677 = vmatpush1.msra.mxu0 0.0
        %1678 = vmatprep.subr.mxu0 0.0
        %1679 = vmatpush1.msra.mxu0 0.0
        %1680 = vmatprep.subr.mxu0 0.0
        %1681 = vmatpush1.msra.mxu0 0.0
        %1682 = vmatprep.subr.mxu0 0.0
        %1683 = vmatpush1.msra.mxu0 0.0
        %1684 = vmatprep.mubr.f32.mxu0 0.0
        %1685 = vmatmul.mubr.f32.gmra.mrb[0].mxu0 %v1609
        %v1686 = vpop.f32.mrb[0].mxu0
        %v1687 = vadd.f32 %v1590, %v1686
        %v1688 = vpop.f32.mrb[0].mxu0
        %v1689 = vadd.f32 %v1590, %v1688
        %1690 = vmatprep.mubr.f32.mxu0 0.0
        %1691 = vmatmul.mubr.f32.gmra.mrb[0].mxu0 %v1612
        %v1692 = vpop.f32.mrb[0].mxu0
        %v1693 = vadd.f32 %v1595, %v1692
        %v1694 = vpop.f32.mrb[0].mxu0
        %v1695 = vadd.f32 %v1595, %v1694
        %1696 = vmatprep.mubr.f32.mxu0 0.0
        %1697 = vmatmul.mubr.f32.gmra.mrb[0].mxu0 %v1615
        %v1698 = vpop.f32.mrb[0].mxu0
        %v1699 = vadd.f32 %v1600, %v1698
        %v1700 = vpop.f32.mrb[0].mxu0
        %v1701 = vadd.f32 %v1600, %v1700
        %1702 = vmatprep.mubr.f32.mxu0 0.0
        %1703 = vmatmul.mubr.f32.gmra.mrb[0].mxu0 %v1618
        %v1704 = vpop.f32.mrb[0].mxu0
        %v1705 = vadd.f32 %v1605, %v1704
        %v1706 = vpop.f32.mrb[0].mxu0
        %v1707 = vadd.f32 %v1605, %v1706
        %1708 = vdwg.mxu0
        %1709 = vmatprep.subr.mxu0 %v1550
        %1710 = vmatpush1.msra.mxu0 %v1549
        %1711 = vmatprep.subr.mxu0 %v1558
        %1712 = vmatpush1.msra.mxu0 %v1557
        %1713 = vmatprep.subr.mxu0 %v1566
        %1714 = vmatpush1.msra.mxu0 %v1565
        %1715 = vmatprep.subr.mxu0 %v1574
        %1716 = vmatpush1.msra.mxu0 %v1573
        %1717 = vmatprep.subr.mxu0 0.0
        %1718 = vmatpush1.msra.mxu0 0.0
        %1719 = vmatprep.subr.mxu0 0.0
        %1720 = vmatpush1.msra.mxu0 0.0
        %1721 = vmatprep.subr.mxu0 0.0
        %1722 = vmatpush1.msra.mxu0 0.0
        %1723 = vmatprep.subr.mxu0 0.0
        %1724 = vmatpush1.msra.mxu0 0.0
        %1725 = vmatprep.subr.mxu0 0.0
        %1726 = vmatpush1.msra.mxu0 0.0
        %1727 = vmatprep.subr.mxu0 0.0
        %1728 = vmatpush1.msra.mxu0 0.0
        %1729 = vmatprep.subr.mxu0 0.0
        %1730 = vmatpush1.msra.mxu0 0.0
        %1731 = vmatprep.subr.mxu0 0.0
        %1732 = vmatpush1.msra.mxu0 0.0
        %1733 = vmatprep.subr.mxu0 0.0
        %1734 = vmatpush1.msra.mxu0 0.0
        %1735 = vmatprep.subr.mxu0 0.0
        %1736 = vmatpush1.msra.mxu0 0.0
        %1737 = vmatprep.subr.mxu0 0.0
        %1738 = vmatpush1.msra.mxu0 0.0
        %1739 = vmatprep.subr.mxu0 0.0
        %1740 = vmatpush1.msra.mxu0 0.0
        %1741 = vmatprep.subr.mxu0 0.0
        %1742 = vmatpush1.msra.mxu0 0.0
        %1743 = vmatprep.subr.mxu0 0.0
        %1744 = vmatpush1.msra.mxu0 0.0
        %1745 = vmatprep.subr.mxu0 0.0
        %1746 = vmatpush1.msra.mxu0 0.0
        %1747 = vmatprep.subr.mxu0 0.0
        %1748 = vmatpush1.msra.mxu0 0.0
        %1749 = vmatprep.subr.mxu0 0.0
        %1750 = vmatpush1.msra.mxu0 0.0
        %1751 = vmatprep.subr.mxu0 0.0
        %1752 = vmatpush1.msra.mxu0 0.0
        %1753 = vmatprep.subr.mxu0 0.0
        %1754 = vmatpush1.msra.mxu0 0.0
        %1755 = vmatprep.subr.mxu0 0.0
        %1756 = vmatpush1.msra.mxu0 0.0
        %1757 = vmatprep.subr.mxu0 0.0
        %1758 = vmatpush1.msra.mxu0 0.0
        %1759 = vmatprep.subr.mxu0 0.0
        %1760 = vmatpush1.msra.mxu0 0.0
        %1761 = vmatprep.subr.mxu0 0.0
        %1762 = vmatpush1.msra.mxu0 0.0
        %1763 = vmatprep.subr.mxu0 0.0
        %1764 = vmatpush1.msra.mxu0 0.0
        %1765 = vmatprep.subr.mxu0 0.0
        %1766 = vmatpush1.msra.mxu0 0.0
        %1767 = vmatprep.subr.mxu0 0.0
        %1768 = vmatpush1.msra.mxu0 0.0
        %1769 = vmatprep.subr.mxu0 0.0
        %1770 = vmatpush1.msra.mxu0 0.0
        %1771 = vmatprep.subr.mxu0 0.0
        %1772 = vmatpush1.msra.mxu0 0.0
        %1773 = vmatprep.mubr.f32.mxu0 0.0
        %1774 = vmatmul.mubr.f32.gmra.mrb[0].mxu0 %v1609
        %v1775 = vpop.f32.mrb[0].mxu0
        %v1776 = vadd.f32 %v1590, %v1775
        %v1777 = vpop.f32.mrb[0].mxu0
        %v1778 = vadd.f32 %v1590, %v1777
        %1779 = vmatprep.mubr.f32.mxu0 0.0
        %1780 = vmatmul.mubr.f32.gmra.mrb[0].mxu0 %v1612
        %v1781 = vpop.f32.mrb[0].mxu0
        %v1782 = vadd.f32 %v1595, %v1781
        %v1783 = vpop.f32.mrb[0].mxu0
        %v1784 = vadd.f32 %v1595, %v1783
        %1785 = vmatprep.mubr.f32.mxu0 0.0
        %1786 = vmatmul.mubr.f32.gmra.mrb[0].mxu0 %v1615
        %v1787 = vpop.f32.mrb[0].mxu0
        %v1788 = vadd.f32 %v1600, %v1787
        %v1789 = vpop.f32.mrb[0].mxu0
        %v1790 = vadd.f32 %v1600, %v1789
        %1791 = vmatprep.mubr.f32.mxu0 0.0
        %1792 = vmatmul.mubr.f32.gmra.mrb[0].mxu0 %v1618
        %v1793 = vpop.f32.mrb[0].mxu0
        %v1794 = vadd.f32 %v1605, %v1793
        %v1795 = vpop.f32.mrb[0].mxu0
        %v1796 = vadd.f32 %v1605, %v1795
        %1797 = vdwg.mxu0
        %1798 = vmatprep.subr.mxu0 %v1552
        %1799 = vmatpush1.msra.mxu0 %v1551
        %1800 = vmatprep.subr.mxu0 %v1560
        %1801 = vmatpush1.msra.mxu0 %v1559
        %1802 = vmatprep.subr.mxu0 %v1568
        %1803 = vmatpush1.msra.mxu0 %v1567
        %1804 = vmatprep.subr.mxu0 %v1576
        %1805 = vmatpush1.msra.mxu0 %v1575
        %1806 = vmatprep.subr.mxu0 0.0
        %1807 = vmatpush1.msra.mxu0 0.0
        %1808 = vmatprep.subr.mxu0 0.0
        %1809 = vmatpush1.msra.mxu0 0.0
        %1810 = vmatprep.subr.mxu0 0.0
        %1811 = vmatpush1.msra.mxu0 0.0
        %1812 = vmatprep.subr.mxu0 0.0
        %1813 = vmatpush1.msra.mxu0 0.0
        %1814 = vmatprep.subr.mxu0 0.0
        %1815 = vmatpush1.msra.mxu0 0.0
        %1816 = vmatprep.subr.mxu0 0.0
        %1817 = vmatpush1.msra.mxu0 0.0
        %1818 = vmatprep.subr.mxu0 0.0
        %1819 = vmatpush1.msra.mxu0 0.0
        %1820 = vmatprep.subr.mxu0 0.0
        %1821 = vmatpush1.msra.mxu0 0.0
        %1822 = vmatprep.subr.mxu0 0.0
        %1823 = vmatpush1.msra.mxu0 0.0
        %1824 = vmatprep.subr.mxu0 0.0
        %1825 = vmatpush1.msra.mxu0 0.0
        %1826 = vmatprep.subr.mxu0 0.0
        %1827 = vmatpush1.msra.mxu0 0.0
        %1828 = vmatprep.subr.mxu0 0.0
        %1829 = vmatpush1.msra.mxu0 0.0
        %1830 = vmatprep.subr.mxu0 0.0
        %1831 = vmatpush1.msra.mxu0 0.0
        %1832 = vmatprep.subr.mxu0 0.0
        %1833 = vmatpush1.msra.mxu0 0.0
        %1834 = vmatprep.subr.mxu0 0.0
        %1835 = vmatpush1.msra.mxu0 0.0
        %1836 = vmatprep.subr.mxu0 0.0
        %1837 = vmatpush1.msra.mxu0 0.0
        %1838 = vmatprep.subr.mxu0 0.0
        %1839 = vmatpush1.msra.mxu0 0.0
        %1840 = vmatprep.subr.mxu0 0.0
        %1841 = vmatpush1.msra.mxu0 0.0
        %1842 = vmatprep.subr.mxu0 0.0
        %1843 = vmatpush1.msra.mxu0 0.0
        %1844 = vmatprep.subr.mxu0 0.0
        %1845 = vmatpush1.msra.mxu0 0.0
        %1846 = vmatprep.subr.mxu0 0.0
        %1847 = vmatpush1.msra.mxu0 0.0
        %1848 = vmatprep.subr.mxu0 0.0
        %1849 = vmatpush1.msra.mxu0 0.0
        %1850 = vmatprep.subr.mxu0 0.0
        %1851 = vmatpush1.msra.mxu0 0.0
        %1852 = vmatprep.subr.mxu0 0.0
        %1853 = vmatpush1.msra.mxu0 0.0
        %1854 = vmatprep.subr.mxu0 0.0
        %1855 = vmatpush1.msra.mxu0 0.0
        %1856 = vmatprep.subr.mxu0 0.0
        %1857 = vmatpush1.msra.mxu0 0.0
        %1858 = vmatprep.subr.mxu0 0.0
        %1859 = vmatpush1.msra.mxu0 0.0
        %1860 = vmatprep.subr.mxu0 0.0
        %1861 = vmatpush1.msra.mxu0 0.0
        %1862 = vmatprep.mubr.f32.mxu0 0.0
        %1863 = vmatmul.mubr.f32.gmra.mrb[0].mxu0 %v1609
        %v1864 = vpop.f32.mrb[0].mxu0
        %v1865 = vadd.f32 %v1590, %v1864
        %v1866 = vpop.f32.mrb[0].mxu0
        %v1867 = vadd.f32 %v1590, %v1866
        %1868 = vmatprep.mubr.f32.mxu0 0.0
        %1869 = vmatmul.mubr.f32.gmra.mrb[0].mxu0 %v1612
        %v1870 = vpop.f32.mrb[0].mxu0
        %v1871 = vadd.f32 %v1595, %v1870
        %v1872 = vpop.f32.mrb[0].mxu0
        %v1873 = vadd.f32 %v1595, %v1872
        %1874 = vmatprep.mubr.f32.mxu0 0.0
        %1875 = vmatmul.mubr.f32.gmra.mrb[0].mxu0 %v1615
        %v1876 = vpop.f32.mrb[0].mxu0
        %v1877 = vadd.f32 %v1600, %v1876
        %v1878 = vpop.f32.mrb[0].mxu0
        %v1879 = vadd.f32 %v1600, %v1878
        %1880 = vmatprep.mubr.f32.mxu0 0.0
        %1881 = vmatmul.mubr.f32.gmra.mrb[0].mxu0 %v1618
        %v1882 = vpop.f32.mrb[0].mxu0
        %v1883 = vadd.f32 %v1605, %v1882
        %v1884 = vpop.f32.mrb[0].mxu0
        %v1885 = vadd.f32 %v1605, %v1884
        %1886 = vdwg.mxu0
        %1887 = vmatprep.subr.mxu0 %v1554
        %1888 = vmatpush1.msra.mxu0 %v1553
        %1889 = vmatprep.subr.mxu0 %v1562
        %1890 = vmatpush1.msra.mxu0 %v1561
        %1891 = vmatprep.subr.mxu0 %v1570
        %1892 = vmatpush1.msra.mxu0 %v1569
        %1893 = vmatprep.subr.mxu0 %v1578
        %1894 = vmatpush1.msra.mxu0 %v1577
        %1895 = vmatprep.subr.mxu0 0.0
        %1896 = vmatpush1.msra.mxu0 0.0
        %1897 = vmatprep.subr.mxu0 0.0
        %1898 = vmatpush1.msra.mxu0 0.0
        %1899 = vmatprep.subr.mxu0 0.0
        %1900 = vmatpush1.msra.mxu0 0.0
        %1901 = vmatprep.subr.mxu0 0.0
        %1902 = vmatpush1.msra.mxu0 0.0
        %1903 = vmatprep.subr.mxu0 0.0
        %1904 = vmatpush1.msra.mxu0 0.0
        %1905 = vmatprep.subr.mxu0 0.0
        %1906 = vmatpush1.msra.mxu0 0.0
        %1907 = vmatprep.subr.mxu0 0.0
        %1908 = vmatpush1.msra.mxu0 0.0
        %1909 = vmatprep.subr.mxu0 0.0
        %1910 = vmatpush1.msra.mxu0 0.0
        %1911 = vmatprep.subr.mxu0 0.0
        %1912 = vmatpush1.msra.mxu0 0.0
        %1913 = vmatprep.subr.mxu0 0.0
        %1914 = vmatpush1.msra.mxu0 0.0
        %1915 = vmatprep.subr.mxu0 0.0
        %1916 = vmatpush1.msra.mxu0 0.0
        %1917 = vmatprep.subr.mxu0 0.0
        %1918 = vmatpush1.msra.mxu0 0.0
        %1919 = vmatprep.subr.mxu0 0.0
        %1920 = vmatpush1.msra.mxu0 0.0
        %1921 = vmatprep.subr.mxu0 0.0
        %1922 = vmatpush1.msra.mxu0 0.0
        %1923 = vmatprep.subr.mxu0 0.0
        %1924 = vmatpush1.msra.mxu0 0.0
        %1925 = vmatprep.subr.mxu0 0.0
        %1926 = vmatpush1.msra.mxu0 0.0
        %1927 = vmatprep.subr.mxu0 0.0
        %1928 = vmatpush1.msra.mxu0 0.0
        %1929 = vmatprep.subr.mxu0 0.0
        %1930 = vmatpush1.msra.mxu0 0.0
        %1931 = vmatprep.subr.mxu0 0.0
        %1932 = vmatpush1.msra.mxu0 0.0
        %1933 = vmatprep.subr.mxu0 0.0
        %1934 = vmatpush1.msra.mxu0 0.0
        %1935 = vmatprep.subr.mxu0 0.0
        %1936 = vmatpush1.msra.mxu0 0.0
        %1937 = vmatprep.subr.mxu0 0.0
        %1938 = vmatpush1.msra.mxu0 0.0
        %1939 = vmatprep.subr.mxu0 0.0
        %1940 = vmatpush1.msra.mxu0 0.0
        %1941 = vmatprep.subr.mxu0 0.0
        %1942 = vmatpush1.msra.mxu0 0.0
        %1943 = vmatprep.subr.mxu0 0.0
        %1944 = vmatpush1.msra.mxu0 0.0
        %1945 = vmatprep.subr.mxu0 0.0
        %1946 = vmatpush1.msra.mxu0 0.0
        %1947 = vmatprep.subr.mxu0 0.0
        %1948 = vmatpush1.msra.mxu0 0.0
        %1949 = vmatprep.subr.mxu0 0.0
        %1950 = vmatpush1.msra.mxu0 0.0
        %1951 = vmatprep.mubr.f32.mxu0 0.0
        %1952 = vmatmul.mubr.f32.gmra.mrb[0].mxu0 %v1609
        %v1953 = vpop.f32.mrb[0].mxu0
        %v1954 = vadd.f32 %v1590, %v1953
        %v1955 = vpop.f32.mrb[0].mxu0
        %v1956 = vadd.f32 %v1590, %v1955
        %1957 = vmatprep.mubr.f32.mxu0 0.0
        %1958 = vmatmul.mubr.f32.gmra.mrb[0].mxu0 %v1612
        %v1959 = vpop.f32.mrb[0].mxu0
        %v1960 = vadd.f32 %v1595, %v1959
        %v1961 = vpop.f32.mrb[0].mxu0
        %v1962 = vadd.f32 %v1595, %v1961
        %1963 = vmatprep.mubr.f32.mxu0 0.0
        %1964 = vmatmul.mubr.f32.gmra.mrb[0].mxu0 %v1615
        %v1965 = vpop.f32.mrb[0].mxu0
        %v1966 = vadd.f32 %v1600, %v1965
        %v1967 = vpop.f32.mrb[0].mxu0
        %v1968 = vadd.f32 %v1600, %v1967
        %1969 = vmatprep.mubr.f32.mxu0 0.0
        %1970 = vmatmul.mubr.f32.gmra.mrb[0].mxu0 %v1618
        %v1971 = vpop.f32.mrb[0].mxu0
        %v1972 = vadd.f32 %v1605, %v1971
        %v1973 = vpop.f32.mrb[0].mxu0
        %v1974 = vadd.f32 %v1605, %v1973
        %1975 = vdwg.mxu0
        %v1976 = vmul.f32 %v1687, 0.5
        %v1977 = vmul.f32 %v1689, 0.5
        %v1978 = vmul.f32 %v1776, 0.5
        %v1979 = vmul.f32 %v1778, 0.5
        %v1980 = vmul.f32 %v1865, 0.5
        %v1981 = vmul.f32 %v1867, 0.5
        %v1982 = vmul.f32 %v1954, 0.5
        %v1983 = vmul.f32 %v1956, 0.5
        %v1984 = vmul.f32 %v1693, 0.5
        %v1985 = vmul.f32 %v1695, 0.5
        %v1986 = vmul.f32 %v1782, 0.5
        %v1987 = vmul.f32 %v1784, 0.5
        %v1988 = vmul.f32 %v1871, 0.5
        %v1989 = vmul.f32 %v1873, 0.5
        %v1990 = vmul.f32 %v1960, 0.5
        %v1991 = vmul.f32 %v1962, 0.5
        %v1992 = vmul.f32 %v1699, 0.5
        %v1993 = vmul.f32 %v1701, 0.5
        %v1994 = vmul.f32 %v1788, 0.5
        %v1995 = vmul.f32 %v1790, 0.5
        %v1996 = vmul.f32 %v1877, 0.5
        %v1997 = vmul.f32 %v1879, 0.5
        %v1998 = vmul.f32 %v1966, 0.5
        %v1999 = vmul.f32 %v1968, 0.5
        %v2000 = vmul.f32 %v1705, 0.5
        %v2001 = vmul.f32 %v1707, 0.5
        %v2002 = vmul.f32 %v1794, 0.5
        %v2003 = vmul.f32 %v1796, 0.5
        %v2004 = vmul.f32 %v1883, 0.5
        %v2005 = vmul.f32 %v1885, 0.5
        %v2006 = vmul.f32 %v1972, 0.5
        %v2007 = vmul.f32 %v1974, 0.5
        %v2008 = vtanh.pop %v1976
        %v2009 = vtanh.pop %v1977
        %v2010 = vtanh.pop %v1978
        %v2011 = vtanh.pop %v1979
        %v2012 = vtanh.pop %v1980
        %v2013 = vtanh.pop %v1981
        %v2014 = vtanh.pop %v1982
        %v2015 = vtanh.pop %v1983
        %v2016 = vtanh.pop %v1984
        %v2017 = vtanh.pop %v1985
        %v2018 = vtanh.pop %v1986
        %v2019 = vtanh.pop %v1987
        %v2020 = vtanh.pop %v1988
        %v2021 = vtanh.pop %v1989
        %v2022 = vtanh.pop %v1990
        %v2023 = vtanh.pop %v1991
        %v2024 = vtanh.pop %v1992
        %v2025 = vtanh.pop %v1993
        %v2026 = vtanh.pop %v1994
        %v2027 = vtanh.pop %v1995
        %v2028 = vtanh.pop %v1996
        %v2029 = vtanh.pop %v1997
        %v2030 = vtanh.pop %v1998
        %v2031 = vtanh.pop %v1999
        %v2032 = vtanh.pop %v2000
        %v2033 = vtanh.pop %v2001
        %v2034 = vtanh.pop %v2002
        %v2035 = vtanh.pop %v2003
        %v2036 = vtanh.pop %v2004
        %v2037 = vtanh.pop %v2005
        %v2038 = vtanh.pop %v2006
        %v2039 = vtanh.pop %v2007
        %v2040 = vmul.f32 %v2008, 0.5
        %v2041 = vmul.f32 %v2009, 0.5
        %v2042 = vmul.f32 %v2010, 0.5
        %v2043 = vmul.f32 %v2011, 0.5
        %v2044 = vmul.f32 %v2012, 0.5
        %v2045 = vmul.f32 %v2013, 0.5
        %v2046 = vmul.f32 %v2014, 0.5
        %v2047 = vmul.f32 %v2015, 0.5
        %v2048 = vmul.f32 %v2016, 0.5
        %v2049 = vmul.f32 %v2017, 0.5
        %v2050 = vmul.f32 %v2018, 0.5
        %v2051 = vmul.f32 %v2019, 0.5
        %v2052 = vmul.f32 %v2020, 0.5
        %v2053 = vmul.f32 %v2021, 0.5
        %v2054 = vmul.f32 %v2022, 0.5
        %v2055 = vmul.f32 %v2023, 0.5
        %v2056 = vmul.f32 %v2024, 0.5
        %v2057 = vmul.f32 %v2025, 0.5
        %v2058 = vmul.f32 %v2026, 0.5
        %v2059 = vmul.f32 %v2027, 0.5
        %v2060 = vmul.f32 %v2028, 0.5
        %v2061 = vmul.f32 %v2029, 0.5
        %v2062 = vmul.f32 %v2030, 0.5
        %v2063 = vmul.f32 %v2031, 0.5
        %v2064 = vmul.f32 %v2032, 0.5
        %v2065 = vmul.f32 %v2033, 0.5
        %v2066 = vmul.f32 %v2034, 0.5
        %v2067 = vmul.f32 %v2035, 0.5
        %v2068 = vmul.f32 %v2036, 0.5
        %v2069 = vmul.f32 %v2037, 0.5
        %v2070 = vmul.f32 %v2038, 0.5
        %v2071 = vmul.f32 %v2039, 0.5
        %v2072 = vadd.f32 %v2040, 0.5
        %v2073 = vadd.f32 %v2041, 0.5
        %v2074 = vadd.f32 %v2042, 0.5
        %v2075 = vadd.f32 %v2043, 0.5
        %v2076 = vadd.f32 %v2044, 0.5
        %v2077 = vadd.f32 %v2045, 0.5
        %v2078 = vadd.f32 %v2046, 0.5
        %v2079 = vadd.f32 %v2047, 0.5
        %v2080 = vadd.f32 %v2048, 0.5
        %v2081 = vadd.f32 %v2049, 0.5
        %v2082 = vadd.f32 %v2050, 0.5
        %v2083 = vadd.f32 %v2051, 0.5
        %v2084 = vadd.f32 %v2052, 0.5
        %v2085 = vadd.f32 %v2053, 0.5
        %v2086 = vadd.f32 %v2054, 0.5
        %v2087 = vadd.f32 %v2055, 0.5
        %v2088 = vadd.f32 %v2056, 0.5
        %v2089 = vadd.f32 %v2057, 0.5
        %v2090 = vadd.f32 %v2058, 0.5
        %v2091 = vadd.f32 %v2059, 0.5
        %v2092 = vadd.f32 %v2060, 0.5
        %v2093 = vadd.f32 %v2061, 0.5
        %v2094 = vadd.f32 %v2062, 0.5
        %v2095 = vadd.f32 %v2063, 0.5
        %v2096 = vadd.f32 %v2064, 0.5
        %v2097 = vadd.f32 %v2065, 0.5
        %v2098 = vadd.f32 %v2066, 0.5
        %v2099 = vadd.f32 %v2067, 0.5
        %v2100 = vadd.f32 %v2068, 0.5
        %v2101 = vadd.f32 %v2069, 0.5
        %v2102 = vadd.f32 %v2070, 0.5
        %v2103 = vadd.f32 %v2071, 0.5
        %v2104 = vld [vmem:[%s5] sm:$0xff]
        %v2105 = vld [vmem:[%s5 + $0x8] sm:$0xff]
        %v2106 = vld [vmem:[%s5 + $0x10] sm:$0xff]
        %v2107 = vld [vmem:[%s5 + $0x18] sm:$0xff]
        %v2108 = vld [vmem:[%s6] sm:$0xff]
        %v2109 = vld [vmem:[%s6 + $0x8] sm:$0xff]
        %v2110 = vld [vmem:[%s6 + $0x10] sm:$0xff]
        %v2111 = vld [vmem:[%s6 + $0x18] sm:$0xff]
        %2113 = vset.pattern.permute.xlu0 0
        %2114 = vperm.xlu0 %2113, %v2108
        %v2115 = vpop.permute.xlu0 %2114
        %2118 = vset.pattern.permute.xlu0 0
        %2119 = vperm.xlu0 %2118, %v2109
        %v2120 = vpop.permute.xlu0 %2119
        %2123 = vset.pattern.permute.xlu0 0
        %2124 = vperm.xlu0 %2123, %v2110
        %v2125 = vpop.permute.xlu0 %2124
        %2128 = vset.pattern.permute.xlu0 0
        %2129 = vperm.xlu0 %2128, %v2111
        %v2130 = vpop.permute.xlu0 %2129
        %v2133 = vsel %vm1607, %v2104, 0
        %v2136 = vsel %vm1607, %v2105, 0
        %v2139 = vsel %vm1607, %v2106, 0
        %v2142 = vsel %vm1607, %v2107, 0
        %2144 = vmatprep.subr.mxu0 %v2073
        %2145 = vmatpush1.msra.mxu0 %v2072
        %2146 = vmatprep.subr.mxu0 %v2081
        %2147 = vmatpush1.msra.mxu0 %v2080
        %2148 = vmatprep.subr.mxu0 %v2089
        %2149 = vmatpush1.msra.mxu0 %v2088
        %2150 = vmatprep.subr.mxu0 %v2097
        %2151 = vmatpush1.msra.mxu0 %v2096
        %2152 = vmatprep.subr.mxu0 0.0
        %2153 = vmatpush1.msra.mxu0 0.0
        %2154 = vmatprep.subr.mxu0 0.0
        %2155 = vmatpush1.msra.mxu0 0.0
        %2156 = vmatprep.subr.mxu0 0.0
        %2157 = vmatpush1.msra.mxu0 0.0
        %2158 = vmatprep.subr.mxu0 0.0
        %2159 = vmatpush1.msra.mxu0 0.0
        %2160 = vmatprep.subr.mxu0 0.0
        %2161 = vmatpush1.msra.mxu0 0.0
        %2162 = vmatprep.subr.mxu0 0.0
        %2163 = vmatpush1.msra.mxu0 0.0
        %2164 = vmatprep.subr.mxu0 0.0
        %2165 = vmatpush1.msra.mxu0 0.0
        %2166 = vmatprep.subr.mxu0 0.0
        %2167 = vmatpush1.msra.mxu0 0.0
        %2168 = vmatprep.subr.mxu0 0.0
        %2169 = vmatpush1.msra.mxu0 0.0
        %2170 = vmatprep.subr.mxu0 0.0
        %2171 = vmatpush1.msra.mxu0 0.0
        %2172 = vmatprep.subr.mxu0 0.0
        %2173 = vmatpush1.msra.mxu0 0.0
        %2174 = vmatprep.subr.mxu0 0.0
        %2175 = vmatpush1.msra.mxu0 0.0
        %2176 = vmatprep.subr.mxu0 0.0
        %2177 = vmatpush1.msra.mxu0 0.0
        %2178 = vmatprep.subr.mxu0 0.0
        %2179 = vmatpush1.msra.mxu0 0.0
        %2180 = vmatprep.subr.mxu0 0.0
        %2181 = vmatpush1.msra.mxu0 0.0
        %2182 = vmatprep.subr.mxu0 0.0
        %2183 = vmatpush1.msra.mxu0 0.0
        %2184 = vmatprep.subr.mxu0 0.0
        %2185 = vmatpush1.msra.mxu0 0.0
        %2186 = vmatprep.subr.mxu0 0.0
        %2187 = vmatpush1.msra.mxu0 0.0
        %2188 = vmatprep.subr.mxu0 0.0
        %2189 = vmatpush1.msra.mxu0 0.0
        %2190 = vmatprep.subr.mxu0 0.0
        %2191 = vmatpush1.msra.mxu0 0.0
        %2192 = vmatprep.subr.mxu0 0.0
        %2193 = vmatpush1.msra.mxu0 0.0
        %2194 = vmatprep.subr.mxu0 0.0
        %2195 = vmatpush1.msra.mxu0 0.0
        %2196 = vmatprep.subr.mxu0 0.0
        %2197 = vmatpush1.msra.mxu0 0.0
        %2198 = vmatprep.subr.mxu0 0.0
        %2199 = vmatpush1.msra.mxu0 0.0
        %2200 = vmatprep.subr.mxu0 0.0
        %2201 = vmatpush1.msra.mxu0 0.0
        %2202 = vmatprep.subr.mxu0 0.0
        %2203 = vmatpush1.msra.mxu0 0.0
        %2204 = vmatprep.subr.mxu0 0.0
        %2205 = vmatpush1.msra.mxu0 0.0
        %2206 = vmatprep.subr.mxu0 0.0
        %2207 = vmatpush1.msra.mxu0 0.0
        %2208 = vmatprep.mubr.f32.mxu0 0.0
        %2209 = vmatmul.mubr.f32.gmra.mrb[0].mxu0 %v2133
        %v2210 = vpop.f32.mrb[0].mxu0
        %v2211 = vadd.f32 %v2115, %v2210
        %v2212 = vpop.f32.mrb[0].mxu0
        %v2213 = vadd.f32 %v2115, %v2212
        %2214 = vmatprep.mubr.f32.mxu0 0.0
        %2215 = vmatmul.mubr.f32.gmra.mrb[0].mxu0 %v2136
        %v2216 = vpop.f32.mrb[0].mxu0
        %v2217 = vadd.f32 %v2120, %v2216
        %v2218 = vpop.f32.mrb[0].mxu0
        %v2219 = vadd.f32 %v2120, %v2218
        %2220 = vmatprep.mubr.f32.mxu0 0.0
        %2221 = vmatmul.mubr.f32.gmra.mrb[0].mxu0 %v2139
        %v2222 = vpop.f32.mrb[0].mxu0
        %v2223 = vadd.f32 %v2125, %v2222
        %v2224 = vpop.f32.mrb[0].mxu0
        %v2225 = vadd.f32 %v2125, %v2224
        %2226 = vmatprep.mubr.f32.mxu0 0.0
        %2227 = vmatmul.mubr.f32.gmra.mrb[0].mxu0 %v2142
        %v2228 = vpop.f32.mrb[0].mxu0
        %v2229 = vadd.f32 %v2130, %v2228
        %v2230 = vpop.f32.mrb[0].mxu0
        %v2231 = vadd.f32 %v2130, %v2230
        %2232 = vdwg.mxu0
        %2233 = vmatprep.subr.mxu0 %v2075
        %2234 = vmatpush1.msra.mxu0 %v2074
        %2235 = vmatprep.subr.mxu0 %v2083
        %2236 = vmatpush1.msra.mxu0 %v2082
        %2237 = vmatprep.subr.mxu0 %v2091
        %2238 = vmatpush1.msra.mxu0 %v2090
        %2239 = vmatprep.subr.mxu0 %v2099
        %2240 = vmatpush1.msra.mxu0 %v2098
        %2241 = vmatprep.subr.mxu0 0.0
        %2242 = vmatpush1.msra.mxu0 0.0
        %2243 = vmatprep.subr.mxu0 0.0
        %2244 = vmatpush1.msra.mxu0 0.0
        %2245 = vmatprep.subr.mxu0 0.0
        %2246 = vmatpush1.msra.mxu0 0.0
        %2247 = vmatprep.subr.mxu0 0.0
        %2248 = vmatpush1.msra.mxu0 0.0
        %2249 = vmatprep.subr.mxu0 0.0
        %2250 = vmatpush1.msra.mxu0 0.0
        %2251 = vmatprep.subr.mxu0 0.0
        %2252 = vmatpush1.msra.mxu0 0.0
        %2253 = vmatprep.subr.mxu0 0.0
        %2254 = vmatpush1.msra.mxu0 0.0
        %2255 = vmatprep.subr.mxu0 0.0
        %2256 = vmatpush1.msra.mxu0 0.0
        %2257 = vmatprep.subr.mxu0 0.0
        %2258 = vmatpush1.msra.mxu0 0.0
        %2259 = vmatprep.subr.mxu0 0.0
        %2260 = vmatpush1.msra.mxu0 0.0
        %2261 = vmatprep.subr.mxu0 0.0
        %2262 = vmatpush1.msra.mxu0 0.0
        %2263 = vmatprep.subr.mxu0 0.0
        %2264 = vmatpush1.msra.mxu0 0.0
        %2265 = vmatprep.subr.mxu0 0.0
        %2266 = vmatpush1.msra.mxu0 0.0
        %2267 = vmatprep.subr.mxu0 0.0
        %2268 = vmatpush1.msra.mxu0 0.0
        %2269 = vmatprep.subr.mxu0 0.0
        %2270 = vmatpush1.msra.mxu0 0.0
        %2271 = vmatprep.subr.mxu0 0.0
        %2272 = vmatpush1.msra.mxu0 0.0
        %2273 = vmatprep.subr.mxu0 0.0
        %2274 = vmatpush1.msra.mxu0 0.0
        %2275 = vmatprep.subr.mxu0 0.0
        %2276 = vmatpush1.msra.mxu0 0.0
        %2277 = vmatprep.subr.mxu0 0.0
        %2278 = vmatpush1.msra.mxu0 0.0
        %2279 = vmatprep.subr.mxu0 0.0
        %2280 = vmatpush1.msra.mxu0 0.0
        %2281 = vmatprep.subr.mxu0 0.0
        %2282 = vmatpush1.msra.mxu0 0.0
        %2283 = vmatprep.subr.mxu0 0.0
        %2284 = vmatpush1.msra.mxu0 0.0
        %2285 = vmatprep.subr.mxu0 0.0
        %2286 = vmatpush1.msra.mxu0 0.0
        %2287 = vmatprep.subr.mxu0 0.0
        %2288 = vmatpush1.msra.mxu0 0.0
        %2289 = vmatprep.subr.mxu0 0.0
        %2290 = vmatpush1.msra.mxu0 0.0
        %2291 = vmatprep.subr.mxu0 0.0
        %2292 = vmatpush1.msra.mxu0 0.0
        %2293 = vmatprep.subr.mxu0 0.0
        %2294 = vmatpush1.msra.mxu0 0.0
        %2295 = vmatprep.subr.mxu0 0.0
        %2296 = vmatpush1.msra.mxu0 0.0
        %2297 = vmatprep.mubr.f32.mxu0 0.0
        %2298 = vmatmul.mubr.f32.gmra.mrb[0].mxu0 %v2133
        %v2299 = vpop.f32.mrb[0].mxu0
        %v2300 = vadd.f32 %v2115, %v2299
        %v2301 = vpop.f32.mrb[0].mxu0
        %v2302 = vadd.f32 %v2115, %v2301
        %2303 = vmatprep.mubr.f32.mxu0 0.0
        %2304 = vmatmul.mubr.f32.gmra.mrb[0].mxu0 %v2136
        %v2305 = vpop.f32.mrb[0].mxu0
        %v2306 = vadd.f32 %v2120, %v2305
        %v2307 = vpop.f32.mrb[0].mxu0
        %v2308 = vadd.f32 %v2120, %v2307
        %2309 = vmatprep.mubr.f32.mxu0 0.0
        %2310 = vmatmul.mubr.f32.gmra.mrb[0].mxu0 %v2139
        %v2311 = vpop.f32.mrb[0].mxu0
        %v2312 = vadd.f32 %v2125, %v2311
        %v2313 = vpop.f32.mrb[0].mxu0
        %v2314 = vadd.f32 %v2125, %v2313
        %2315 = vmatprep.mubr.f32.mxu0 0.0
        %2316 = vmatmul.mubr.f32.gmra.mrb[0].mxu0 %v2142
        %v2317 = vpop.f32.mrb[0].mxu0
        %v2318 = vadd.f32 %v2130, %v2317
        %v2319 = vpop.f32.mrb[0].mxu0
        %v2320 = vadd.f32 %v2130, %v2319
        %2321 = vdwg.mxu0
        %2322 = vmatprep.subr.mxu0 %v2077
        %2323 = vmatpush1.msra.mxu0 %v2076
        %2324 = vmatprep.subr.mxu0 %v2085
        %2325 = vmatpush1.msra.mxu0 %v2084
        %2326 = vmatprep.subr.mxu0 %v2093
        %2327 = vmatpush1.msra.mxu0 %v2092
        %2328 = vmatprep.subr.mxu0 %v2101
        %2329 = vmatpush1.msra.mxu0 %v2100
        %2330 = vmatprep.subr.mxu0 0.0
        %2331 = vmatpush1.msra.mxu0 0.0
        %2332 = vmatprep.subr.mxu0 0.0
        %2333 = vmatpush1.msra.mxu0 0.0
        %2334 = vmatprep.subr.mxu0 0.0
        %2335 = vmatpush1.msra.mxu0 0.0
        %2336 = vmatprep.subr.mxu0 0.0
        %2337 = vmatpush1.msra.mxu0 0.0
        %2338 = vmatprep.subr.mxu0 0.0
        %2339 = vmatpush1.msra.mxu0 0.0
        %2340 = vmatprep.subr.mxu0 0.0
        %2341 = vmatpush1.msra.mxu0 0.0
        %2342 = vmatprep.subr.mxu0 0.0
        %2343 = vmatpush1.msra.mxu0 0.0
        %2344 = vmatprep.subr.mxu0 0.0
        %2345 = vmatpush1.msra.mxu0 0.0
        %2346 = vmatprep.subr.mxu0 0.0
        %2347 = vmatpush1.msra.mxu0 0.0
        %2348 = vmatprep.subr.mxu0 0.0
        %2349 = vmatpush1.msra.mxu0 0.0
        %2350 = vmatprep.subr.mxu0 0.0
        %2351 = vmatpush1.msra.mxu0 0.0
        %2352 = vmatprep.subr.mxu0 0.0
        %2353 = vmatpush1.msra.mxu0 0.0
        %2354 = vmatprep.subr.mxu0 0.0
        %2355 = vmatpush1.msra.mxu0 0.0
        %2356 = vmatprep.subr.mxu0 0.0
        %2357 = vmatpush1.msra.mxu0 0.0
        %2358 = vmatprep.subr.mxu0 0.0
        %2359 = vmatpush1.msra.mxu0 0.0
        %2360 = vmatprep.subr.mxu0 0.0
        %2361 = vmatpush1.msra.mxu0 0.0
        %2362 = vmatprep.subr.mxu0 0.0
        %2363 = vmatpush1.msra.mxu0 0.0
        %2364 = vmatprep.subr.mxu0 0.0
        %2365 = vmatpush1.msra.mxu0 0.0
        %2366 = vmatprep.subr.mxu0 0.0
        %2367 = vmatpush1.msra.mxu0 0.0
        %2368 = vmatprep.subr.mxu0 0.0
        %2369 = vmatpush1.msra.mxu0 0.0
        %2370 = vmatprep.subr.mxu0 0.0
        %2371 = vmatpush1.msra.mxu0 0.0
        %2372 = vmatprep.subr.mxu0 0.0
        %2373 = vmatpush1.msra.mxu0 0.0
        %2374 = vmatprep.subr.mxu0 0.0
        %2375 = vmatpush1.msra.mxu0 0.0
        %2376 = vmatprep.subr.mxu0 0.0
        %2377 = vmatpush1.msra.mxu0 0.0
        %2378 = vmatprep.subr.mxu0 0.0
        %2379 = vmatpush1.msra.mxu0 0.0
        %2380 = vmatprep.subr.mxu0 0.0
        %2381 = vmatpush1.msra.mxu0 0.0
        %2382 = vmatprep.subr.mxu0 0.0
        %2383 = vmatpush1.msra.mxu0 0.0
        %2384 = vmatprep.subr.mxu0 0.0
        %2385 = vmatpush1.msra.mxu0 0.0
        %2386 = vmatprep.mubr.f32.mxu0 0.0
        %2387 = vmatmul.mubr.f32.gmra.mrb[0].mxu0 %v2133
        %v2388 = vpop.f32.mrb[0].mxu0
        %v2389 = vadd.f32 %v2115, %v2388
        %v2390 = vpop.f32.mrb[0].mxu0
        %v2391 = vadd.f32 %v2115, %v2390
        %2392 = vmatprep.mubr.f32.mxu0 0.0
        %2393 = vmatmul.mubr.f32.gmra.mrb[0].mxu0 %v2136
        %v2394 = vpop.f32.mrb[0].mxu0
        %v2395 = vadd.f32 %v2120, %v2394
        %v2396 = vpop.f32.mrb[0].mxu0
        %v2397 = vadd.f32 %v2120, %v2396
        %2398 = vmatprep.mubr.f32.mxu0 0.0
        %2399 = vmatmul.mubr.f32.gmra.mrb[0].mxu0 %v2139
        %v2400 = vpop.f32.mrb[0].mxu0
        %v2401 = vadd.f32 %v2125, %v2400
        %v2402 = vpop.f32.mrb[0].mxu0
        %v2403 = vadd.f32 %v2125, %v2402
        %2404 = vmatprep.mubr.f32.mxu0 0.0
        %2405 = vmatmul.mubr.f32.gmra.mrb[0].mxu0 %v2142
        %v2406 = vpop.f32.mrb[0].mxu0
        %v2407 = vadd.f32 %v2130, %v2406
        %v2408 = vpop.f32.mrb[0].mxu0
        %v2409 = vadd.f32 %v2130, %v2408
        %2410 = vdwg.mxu0
        %2411 = vmatprep.subr.mxu0 %v2079
        %2412 = vmatpush1.msra.mxu0 %v2078
        %2413 = vmatprep.subr.mxu0 %v2087
        %2414 = vmatpush1.msra.mxu0 %v2086
        %2415 = vmatprep.subr.mxu0 %v2095
        %2416 = vmatpush1.msra.mxu0 %v2094
        %2417 = vmatprep.subr.mxu0 %v2103
        %2418 = vmatpush1.msra.mxu0 %v2102
        %2419 = vmatprep.subr.mxu0 0.0
        %2420 = vmatpush1.msra.mxu0 0.0
        %2421 = vmatprep.subr.mxu0 0.0
        %2422 = vmatpush1.msra.mxu0 0.0
        %2423 = vmatprep.subr.mxu0 0.0
        %2424 = vmatpush1.msra.mxu0 0.0
        %2425 = vmatprep.subr.mxu0 0.0
        %2426 = vmatpush1.msra.mxu0 0.0
        %2427 = vmatprep.subr.mxu0 0.0
        %2428 = vmatpush1.msra.mxu0 0.0
        %2429 = vmatprep.subr.mxu0 0.0
        %2430 = vmatpush1.msra.mxu0 0.0
        %2431 = vmatprep.subr.mxu0 0.0
        %2432 = vmatpush1.msra.mxu0 0.0
        %2433 = vmatprep.subr.mxu0 0.0
        %2434 = vmatpush1.msra.mxu0 0.0
        %2435 = vmatprep.subr.mxu0 0.0
        %2436 = vmatpush1.msra.mxu0 0.0
        %2437 = vmatprep.subr.mxu0 0.0
        %2438 = vmatpush1.msra.mxu0 0.0
        %2439 = vmatprep.subr.mxu0 0.0
        %2440 = vmatpush1.msra.mxu0 0.0
        %2441 = vmatprep.subr.mxu0 0.0
        %2442 = vmatpush1.msra.mxu0 0.0
        %2443 = vmatprep.subr.mxu0 0.0
        %2444 = vmatpush1.msra.mxu0 0.0
        %2445 = vmatprep.subr.mxu0 0.0
        %2446 = vmatpush1.msra.mxu0 0.0
        %2447 = vmatprep.subr.mxu0 0.0
        %2448 = vmatpush1.msra.mxu0 0.0
        %2449 = vmatprep.subr.mxu0 0.0
        %2450 = vmatpush1.msra.mxu0 0.0
        %2451 = vmatprep.subr.mxu0 0.0
        %2452 = vmatpush1.msra.mxu0 0.0
        %2453 = vmatprep.subr.mxu0 0.0
        %2454 = vmatpush1.msra.mxu0 0.0
        %2455 = vmatprep.subr.mxu0 0.0
        %2456 = vmatpush1.msra.mxu0 0.0
        %2457 = vmatprep.subr.mxu0 0.0
        %2458 = vmatpush1.msra.mxu0 0.0
        %2459 = vmatprep.subr.mxu0 0.0
        %2460 = vmatpush1.msra.mxu0 0.0
        %2461 = vmatprep.subr.mxu0 0.0
        %2462 = vmatpush1.msra.mxu0 0.0
        %2463 = vmatprep.subr.mxu0 0.0
        %2464 = vmatpush1.msra.mxu0 0.0
        %2465 = vmatprep.subr.mxu0 0.0
        %2466 = vmatpush1.msra.mxu0 0.0
        %2467 = vmatprep.subr.mxu0 0.0
        %2468 = vmatpush1.msra.mxu0 0.0
        %2469 = vmatprep.subr.mxu0 0.0
        %2470 = vmatpush1.msra.mxu0 0.0
        %2471 = vmatprep.subr.mxu0 0.0
        %2472 = vmatpush1.msra.mxu0 0.0
        %2473 = vmatprep.subr.mxu0 0.0
        %2474 = vmatpush1.msra.mxu0 0.0
        %2475 = vmatprep.mubr.f32.mxu0 0.0
        %2476 = vmatmul.mubr.f32.gmra.mrb[0].mxu0 %v2133
        %v2477 = vpop.f32.mrb[0].mxu0
        %v2478 = vadd.f32 %v2115, %v2477
        %v2479 = vpop.f32.mrb[0].mxu0
        %v2480 = vadd.f32 %v2115, %v2479
        %2481 = vmatprep.mubr.f32.mxu0 0.0
        %2482 = vmatmul.mubr.f32.gmra.mrb[0].mxu0 %v2136
        %v2483 = vpop.f32.mrb[0].mxu0
        %v2484 = vadd.f32 %v2120, %v2483
        %v2485 = vpop.f32.mrb[0].mxu0
        %v2486 = vadd.f32 %v2120, %v2485
        %2487 = vmatprep.mubr.f32.mxu0 0.0
        %2488 = vmatmul.mubr.f32.gmra.mrb[0].mxu0 %v2139
        %v2489 = vpop.f32.mrb[0].mxu0
        %v2490 = vadd.f32 %v2125, %v2489
        %v2491 = vpop.f32.mrb[0].mxu0
        %v2492 = vadd.f32 %v2125, %v2491
        %2493 = vmatprep.mubr.f32.mxu0 0.0
        %2494 = vmatmul.mubr.f32.gmra.mrb[0].mxu0 %v2142
        %v2495 = vpop.f32.mrb[0].mxu0
        %v2496 = vadd.f32 %v2130, %v2495
        %v2497 = vpop.f32.mrb[0].mxu0
        %v2498 = vadd.f32 %v2130, %v2497
        %2499 = vdwg.mxu0
        %v2500 = vmul.f32 %v2211, 0.5
        %v2501 = vmul.f32 %v2213, 0.5
        %v2502 = vmul.f32 %v2300, 0.5
        %v2503 = vmul.f32 %v2302, 0.5
        %v2504 = vmul.f32 %v2389, 0.5
        %v2505 = vmul.f32 %v2391, 0.5
        %v2506 = vmul.f32 %v2478, 0.5
        %v2507 = vmul.f32 %v2480, 0.5
        %v2508 = vmul.f32 %v2217, 0.5
        %v2509 = vmul.f32 %v2219, 0.5
        %v2510 = vmul.f32 %v2306, 0.5
        %v2511 = vmul.f32 %v2308, 0.5
        %v2512 = vmul.f32 %v2395, 0.5
        %v2513 = vmul.f32 %v2397, 0.5
        %v2514 = vmul.f32 %v2484, 0.5
        %v2515 = vmul.f32 %v2486, 0.5
        %v2516 = vmul.f32 %v2223, 0.5
        %v2517 = vmul.f32 %v2225, 0.5
        %v2518 = vmul.f32 %v2312, 0.5
        %v2519 = vmul.f32 %v2314, 0.5
        %v2520 = vmul.f32 %v2401, 0.5
        %v2521 = vmul.f32 %v2403, 0.5
        %v2522 = vmul.f32 %v2490, 0.5
        %v2523 = vmul.f32 %v2492, 0.5
        %v2524 = vmul.f32 %v2229, 0.5
        %v2525 = vmul.f32 %v2231, 0.5
        %v2526 = vmul.f32 %v2318, 0.5
        %v2527 = vmul.f32 %v2320, 0.5
        %v2528 = vmul.f32 %v2407, 0.5
        %v2529 = vmul.f32 %v2409, 0.5
        %v2530 = vmul.f32 %v2496, 0.5
        %v2531 = vmul.f32 %v2498, 0.5
        %v2532 = vtanh.pop %v2500
        %v2533 = vtanh.pop %v2501
        %v2534 = vtanh.pop %v2502
        %v2535 = vtanh.pop %v2503
        %v2536 = vtanh.pop %v2504
        %v2537 = vtanh.pop %v2505
        %v2538 = vtanh.pop %v2506
        %v2539 = vtanh.pop %v2507
        %v2540 = vtanh.pop %v2508
        %v2541 = vtanh.pop %v2509
        %v2542 = vtanh.pop %v2510
        %v2543 = vtanh.pop %v2511
        %v2544 = vtanh.pop %v2512
        %v2545 = vtanh.pop %v2513
        %v2546 = vtanh.pop %v2514
        %v2547 = vtanh.pop %v2515
        %v2548 = vtanh.pop %v2516
        %v2549 = vtanh.pop %v2517
        %v2550 = vtanh.pop %v2518
        %v2551 = vtanh.pop %v2519
        %v2552 = vtanh.pop %v2520
        %v2553 = vtanh.pop %v2521
        %v2554 = vtanh.pop %v2522
        %v2555 = vtanh.pop %v2523
        %v2556 = vtanh.pop %v2524
        %v2557 = vtanh.pop %v2525
        %v2558 = vtanh.pop %v2526
        %v2559 = vtanh.pop %v2527
        %v2560 = vtanh.pop %v2528
        %v2561 = vtanh.pop %v2529
        %v2562 = vtanh.pop %v2530
        %v2563 = vtanh.pop %v2531
        %v2564 = vmul.f32 %v2532, 0.5
        %v2565 = vmul.f32 %v2533, 0.5
        %v2566 = vmul.f32 %v2534, 0.5
        %v2567 = vmul.f32 %v2535, 0.5
        %v2568 = vmul.f32 %v2536, 0.5
        %v2569 = vmul.f32 %v2537, 0.5
        %v2570 = vmul.f32 %v2538, 0.5
        %v2571 = vmul.f32 %v2539, 0.5
        %v2572 = vmul.f32 %v2540, 0.5
        %v2573 = vmul.f32 %v2541, 0.5
        %v2574 = vmul.f32 %v2542, 0.5
        %v2575 = vmul.f32 %v2543, 0.5
        %v2576 = vmul.f32 %v2544, 0.5
        %v2577 = vmul.f32 %v2545, 0.5
        %v2578 = vmul.f32 %v2546, 0.5
        %v2579 = vmul.f32 %v2547, 0.5
        %v2580 = vmul.f32 %v2548, 0.5
        %v2581 = vmul.f32 %v2549, 0.5
        %v2582 = vmul.f32 %v2550, 0.5
        %v2583 = vmul.f32 %v2551, 0.5
        %v2584 = vmul.f32 %v2552, 0.5
        %v2585 = vmul.f32 %v2553, 0.5
        %v2586 = vmul.f32 %v2554, 0.5
        %v2587 = vmul.f32 %v2555, 0.5
        %v2588 = vmul.f32 %v2556, 0.5
        %v2589 = vmul.f32 %v2557, 0.5
        %v2590 = vmul.f32 %v2558, 0.5
        %v2591 = vmul.f32 %v2559, 0.5
        %v2592 = vmul.f32 %v2560, 0.5
        %v2593 = vmul.f32 %v2561, 0.5
        %v2594 = vmul.f32 %v2562, 0.5
        %v2595 = vmul.f32 %v2563, 0.5
        %v2596 = vadd.f32 %v2564, 0.5
        %v2597 = vadd.f32 %v2565, 0.5
        %v2598 = vadd.f32 %v2566, 0.5
        %v2599 = vadd.f32 %v2567, 0.5
        %v2600 = vadd.f32 %v2568, 0.5
        %v2601 = vadd.f32 %v2569, 0.5
        %v2602 = vadd.f32 %v2570, 0.5
        %v2603 = vadd.f32 %v2571, 0.5
        %v2604 = vadd.f32 %v2572, 0.5
        %v2605 = vadd.f32 %v2573, 0.5
        %v2606 = vadd.f32 %v2574, 0.5
        %v2607 = vadd.f32 %v2575, 0.5
        %v2608 = vadd.f32 %v2576, 0.5
        %v2609 = vadd.f32 %v2577, 0.5
        %v2610 = vadd.f32 %v2578, 0.5
        %v2611 = vadd.f32 %v2579, 0.5
        %v2612 = vadd.f32 %v2580, 0.5
        %v2613 = vadd.f32 %v2581, 0.5
        %v2614 = vadd.f32 %v2582, 0.5
        %v2615 = vadd.f32 %v2583, 0.5
        %v2616 = vadd.f32 %v2584, 0.5
        %v2617 = vadd.f32 %v2585, 0.5
        %v2618 = vadd.f32 %v2586, 0.5
        %v2619 = vadd.f32 %v2587, 0.5
        %v2620 = vadd.f32 %v2588, 0.5
        %v2621 = vadd.f32 %v2589, 0.5
        %v2622 = vadd.f32 %v2590, 0.5
        %v2623 = vadd.f32 %v2591, 0.5
        %v2624 = vadd.f32 %v2592, 0.5
        %v2625 = vadd.f32 %v2593, 0.5
        %v2626 = vadd.f32 %v2594, 0.5
        %v2627 = vadd.f32 %v2595, 0.5
        %v2628 = vld [vmem:[%s7] sm:$0xff]
        %v2629 = vld [vmem:[%s7 + $0x8] sm:$0xff]
        %v2630 = vld [vmem:[%s7 + $0x10] sm:$0xff]
        %v2631 = vld [vmem:[%s7 + $0x18] sm:$0xff]
        %2633 = vset.pattern.permute.xlu0 0
        %2634 = vperm.xlu0 %2633, %v2628
        %v2635 = vpop.permute.xlu0 %2634
        %2638 = vset.pattern.permute.xlu0 0
        %2639 = vperm.xlu0 %2638, %v2629
        %v2640 = vpop.permute.xlu0 %2639
        %2643 = vset.pattern.permute.xlu0 0
        %2644 = vperm.xlu0 %2643, %v2630
        %v2645 = vpop.permute.xlu0 %2644
        %2648 = vset.pattern.permute.xlu0 0
        %2649 = vperm.xlu0 %2648, %v2631
        %v2650 = vpop.permute.xlu0 %2649
        %v2652 = vmul.f32 %v2635, %v2596
        %v2653 = vmul.f32 %v2635, %v2597
        %v2654 = vmul.f32 %v2635, %v2598
        %v2655 = vmul.f32 %v2635, %v2599
        %v2656 = vmul.f32 %v2635, %v2600
        %v2657 = vmul.f32 %v2635, %v2601
        %v2658 = vmul.f32 %v2635, %v2602
        %v2659 = vmul.f32 %v2635, %v2603
        %v2660 = vmul.f32 %v2640, %v2604
        %v2661 = vmul.f32 %v2640, %v2605
        %v2662 = vmul.f32 %v2640, %v2606
        %v2663 = vmul.f32 %v2640, %v2607
        %v2664 = vmul.f32 %v2640, %v2608
        %v2665 = vmul.f32 %v2640, %v2609
        %v2666 = vmul.f32 %v2640, %v2610
        %v2667 = vmul.f32 %v2640, %v2611
        %v2668 = vmul.f32 %v2645, %v2612
        %v2669 = vmul.f32 %v2645, %v2613
        %v2670 = vmul.f32 %v2645, %v2614
        %v2671 = vmul.f32 %v2645, %v2615
        %v2672 = vmul.f32 %v2645, %v2616
        %v2673 = vmul.f32 %v2645, %v2617
        %v2674 = vmul.f32 %v2645, %v2618
        %v2675 = vmul.f32 %v2645, %v2619
        %v2676 = vmul.f32 %v2650, %v2620
        %v2677 = vmul.f32 %v2650, %v2621
        %v2678 = vmul.f32 %v2650, %v2622
        %v2679 = vmul.f32 %v2650, %v2623
        %v2680 = vmul.f32 %v2650, %v2624
        %v2681 = vmul.f32 %v2650, %v2625
        %v2682 = vmul.f32 %v2650, %v2626
        %v2683 = vmul.f32 %v2650, %v2627
        %v2684 = vadd.f32 %v2652, %v2660
        %v2685 = vadd.f32 %v2684, %v2668
        %v2686 = vadd.f32 %v2685, %v2676
        %v2687 = vrot.slane %v2686, 4
        %v2688 = vadd.f32 %v2686, %v2687
        %v2689 = vrot.slane %v2688, 2
        %v2690 = vadd.f32 %v2688, %v2689
        %v2691 = vrot.slane %v2690, 1
        %v2692 = vadd.f32 %v2690, %v2691
        %v2693 = vadd.f32 %v2653, %v2661
        %v2694 = vadd.f32 %v2693, %v2669
        %v2695 = vadd.f32 %v2694, %v2677
        %v2696 = vrot.slane %v2695, 4
        %v2697 = vadd.f32 %v2695, %v2696
        %v2698 = vrot.slane %v2697, 2
        %v2699 = vadd.f32 %v2697, %v2698
        %v2700 = vrot.slane %v2699, 1
        %v2701 = vadd.f32 %v2699, %v2700
        %v2702 = vadd.f32 %v2654, %v2662
        %v2703 = vadd.f32 %v2702, %v2670
        %v2704 = vadd.f32 %v2703, %v2678
        %v2705 = vrot.slane %v2704, 4
        %v2706 = vadd.f32 %v2704, %v2705
        %v2707 = vrot.slane %v2706, 2
        %v2708 = vadd.f32 %v2706, %v2707
        %v2709 = vrot.slane %v2708, 1
        %v2710 = vadd.f32 %v2708, %v2709
        %v2711 = vadd.f32 %v2655, %v2663
        %v2712 = vadd.f32 %v2711, %v2671
        %v2713 = vadd.f32 %v2712, %v2679
        %v2714 = vrot.slane %v2713, 4
        %v2715 = vadd.f32 %v2713, %v2714
        %v2716 = vrot.slane %v2715, 2
        %v2717 = vadd.f32 %v2715, %v2716
        %v2718 = vrot.slane %v2717, 1
        %v2719 = vadd.f32 %v2717, %v2718
        %v2720 = vadd.f32 %v2656, %v2664
        %v2721 = vadd.f32 %v2720, %v2672
        %v2722 = vadd.f32 %v2721, %v2680
        %v2723 = vrot.slane %v2722, 4
        %v2724 = vadd.f32 %v2722, %v2723
        %v2725 = vrot.slane %v2724, 2
        %v2726 = vadd.f32 %v2724, %v2725
        %v2727 = vrot.slane %v2726, 1
        %v2728 = vadd.f32 %v2726, %v2727
        %v2729 = vadd.f32 %v2657, %v2665
        %v2730 = vadd.f32 %v2729, %v2673
        %v2731 = vadd.f32 %v2730, %v2681
        %v2732 = vrot.slane %v2731, 4
        %v2733 = vadd.f32 %v2731, %v2732
        %v2734 = vrot.slane %v2733, 2
        %v2735 = vadd.f32 %v2733, %v2734
        %v2736 = vrot.slane %v2735, 1
        %v2737 = vadd.f32 %v2735, %v2736
        %v2738 = vadd.f32 %v2658, %v2666
        %v2739 = vadd.f32 %v2738, %v2674
        %v2740 = vadd.f32 %v2739, %v2682
        %v2741 = vrot.slane %v2740, 4
        %v2742 = vadd.f32 %v2740, %v2741
        %v2743 = vrot.slane %v2742, 2
        %v2744 = vadd.f32 %v2742, %v2743
        %v2745 = vrot.slane %v2744, 1
        %v2746 = vadd.f32 %v2744, %v2745
        %v2747 = vadd.f32 %v2659, %v2667
        %v2748 = vadd.f32 %v2747, %v2675
        %v2749 = vadd.f32 %v2748, %v2683
        %v2750 = vrot.slane %v2749, 4
        %v2751 = vadd.f32 %v2749, %v2750
        %v2752 = vrot.slane %v2751, 2
        %v2753 = vadd.f32 %v2751, %v2752
        %v2754 = vrot.slane %v2753, 1
        %v2755 = vadd.f32 %v2753, %v2754
        %v2756 = vld [vmem:[#allocation2] sm:$0x1]
        %2758 = vset.pattern.permute.xlu0 0
        %2759 = vperm.xlu0 %2758, %v2756
        %v2760 = vpop.permute.xlu0 %2759
        %v2762 = vlaneseq
        %v2763 = vshrl.u32 %v2762, 7
        %v2764 = vsub.s32 0, %v2763
        %v2765 = vrot.slane %v2760, %v2764
        %v2766 = vadd.f32 %v2692, %v2765
        %v2767 = vadd.f32 %v2701, %v2765
        %v2768 = vadd.f32 %v2710, %v2765
        %v2769 = vadd.f32 %v2719, %v2765
        %v2770 = vadd.f32 %v2728, %v2765
        %v2771 = vadd.f32 %v2737, %v2765
        %v2772 = vadd.f32 %v2746, %v2765
        %v2773 = vadd.f32 %v2755, %v2765
        %v2782 = vcombine.low %v2766, %v2767
        %v2783 = vcombine.low %v2768, %v2769
        %v2784 = vcombine.low %v2770, %v2771
        %v2785 = vcombine.low %v2772, %v2773
        %v2787 = vunpack.c.l.s4 1966171168
        %v2788 = vunpack.c.0.s8 %v2787
        %v2789 = vlaneseq
        %v2790 = vshrl.u32 %v2789, 7
        %v2791 = vsub.s32 %v2788, %v2790
        %v2792 = vrot.slane %v2782, %v2791
        %v2794 = vunpack.c.l.s4 1966171168
        %v2795 = vunpack.c.0.s8 %v2794
        %v2796 = vlaneseq
        %v2797 = vshrl.u32 %v2796, 7
        %v2798 = vsub.s32 %v2795, %v2797
        %v2799 = vrot.slane %v2783, %v2798
        %v2801 = vunpack.c.l.s4 1966171168
        %v2802 = vunpack.c.0.s8 %v2801
        %v2803 = vlaneseq
        %v2804 = vshrl.u32 %v2803, 7
        %v2805 = vsub.s32 %v2802, %v2804
        %v2806 = vrot.slane %v2784, %v2805
        %v2808 = vunpack.c.l.s4 1966171168
        %v2809 = vunpack.c.0.s8 %v2808
        %v2810 = vlaneseq
        %v2811 = vshrl.u32 %v2810, 7
        %v2812 = vsub.s32 %v2809, %v2811
        %v2813 = vrot.slane %v2785, %v2812
        %v2814 = vcombine.low %v2792, %v2799
        %v2815 = vcombine.low %v2806, %v2813
        %v2817 = vunpack.c.l.s4 1966171168
        %v2818 = vunpack.c.0.s8 %v2817
        %v2819 = vlaneseq
        %v2820 = vshrl.u32 %v2819, 7
        %v2821 = vsub.s32 %v2818, %v2820
        %v2822 = vrot.slane %v2814, %v2821
        %v2824 = vunpack.c.l.s4 1966171168
        %v2825 = vunpack.c.0.s8 %v2824
        %v2826 = vlaneseq
        %v2827 = vshrl.u32 %v2826, 7
        %v2828 = vsub.s32 %v2825, %v2827
        %v2829 = vrot.slane %v2815, %v2828
        %v2830 = vcombine.low %v2822, %v2829
        %2832 = vst [vmem:[%s350] sm:$0xff] %v2830
        %s2833 = sand.u32 %s230, 1
        %s2834 = scalar_lea.sflag [#allocation5], %s2833
        %s2835 = sand.u32 %s230, 1
        %s2836 = smul.addr %s2835, 8
        %s2837 = scalar_lea.vmem [#allocation6], %s2836
        // Predicated region
        $region61: #{tpu_custom_call.1} parent=55 // pred_check
          %p2838 = pneg %p240
        $region62: #{tpu_custom_call.1} parent=55 // pred_check_branch
          %2840 = sbr.rel (%p2838) target = $region64
        $region63: #{tpu_custom_call.1} parent=55 // pred_region
          %s2841 = smul.u32 8, %s28
          %s2843 = ssub.s32 128, 128
          %2844 = vsyncadd %s2834, %s2843
          %s2845 = smul.addr %s2841, 16
          %s2846 = scalar_lea.hbm %s9, %s2845
          %s2848 = sshll.u32 %s2837, 4
          %s2849 = int_to_ptr.vmem [resolvable:$true] %s2848
          %2851 = dma.vmem_to_hbm [thread:$0]  %s2849, 128, %s2846, %s2834
        $region64: #{tpu_custom_call.1} parent=55 // pred_fallthru
          _
      $region56: #{tpu_custom_call.1} parent=5 // pred_fallthru
        _
      %p2852 = scmp.le.s32.totalorder 2, %s23
      // Predicated region
      $region65: #{tpu_custom_call.1} parent=5 // pred_check
        %p2853 = pneg %p2852
      $region66: #{tpu_custom_call.1} parent=5 // pred_check_branch
        %2855 = sbr.rel (%p2853) target = $region68
      $region67: #{tpu_custom_call.1} parent=5 // pred_region
        %s2856 = ssub.s32 %s23, 2
        // Predicated region
        $region69: #{tpu_custom_call.1} parent=67 // pred_check
          %p2857 = pneg %p246
        $region70: #{tpu_custom_call.1} parent=67 // pred_check_branch
          %2859 = sbr.rel (%p2857) target = $region72
        $region71: #{tpu_custom_call.1} parent=67 // pred_region
          %s2860 = sand.u32 %s231, 1
          %s2861 = scalar_lea.sflag [#allocation5], %s2860
          %s2862 = sand.u32 %s231, 1
          %s2863 = smul.addr %s2862, 8
          %s2864 = scalar_lea.vmem [#allocation6], %s2863
          %2865 = dma.done %s2861, 128
        $region72: #{tpu_custom_call.1} parent=67 // pred_fallthru
          _
      $region68: #{tpu_custom_call.1} parent=5 // pred_fallthru
        _
    $region6: #{tpu_custom_call.1} parent=1 // loop_footer
      %s27 = sadd.s32 1, %s23
    $region7: #{tpu_custom_call.1} parent=1 // loop_footer_branch
      %22 = sbr.rel target = $region3
    $region8: #{tpu_custom_call.1} parent=1 // loop_exit
      _
    %2866 = vsyncpa [#allocation4], 1
    %s2867 = scalar_lea.sflag [#allocation4], 1
    %2868 = vsyncpa %s2867, 1
    %2869 = vsyncpa [#allocation5], 1
    %s2870 = scalar_lea.sflag [#allocation5], 1
    %2871 = vsyncpa %s2870, 1

</llo_original>
